<compile_context>
chip_gen: v7x
topology: tpu7x:2x2x1
jax: 0.10.0
libtpu: 0.0.40
codegen_flags: <defaults>
</compile_context>

<pallas_src>
import math
from functools import partial

import jax
import jax.numpy as jnp
from jax import lax
from jax.experimental import pallas as pl
from jax.experimental.pallas import tpu as pltpu


def _round_up(x, m):
    return ((x + m - 1) // m) * m


# ----------------------------- Pallas kernel --------------------------------
def _lns_conv_kernel(patches_ref, w_ref, b_ref, out_ref, log_ref, sign_ref,
                     *, inv_log_base):
    """Produces one (TILE_P, TILE_N) output tile, reduced over the K grid axis.

    out_ref itself is the accumulator: its index_map ignores the K axis, so the
    f32 block stays resident in VMEM across the whole K loop.
    """
    k = pl.program_id(2)

    @pl.when(k == 0)
    def _():
        out_ref[...] = jnp.zeros_like(out_ref)

    # bf16 x bf16 -> f32 accumulation on the MXU.
    out_ref[...] += jnp.dot(patches_ref[...], w_ref[...],
                            preferred_element_type=jnp.float32)

    @pl.when(k == pl.num_programs(2) - 1)
    def _():
        acc = out_ref[...] + b_ref[...]            # b_ref is (1, TILE_N), broadcasts
        out_ref[...] = acc
        # LNS log-magnitude: log_base(|x|).  Exact zeros map to -inf, the natural
        # LNS encoding of 0 (reconstructs to 0 via sign * base**log).
        log_ref[...] = jnp.log(jnp.abs(acc)) * inv_log_base
        # Sign as int8: essentially free on the VPU while the MXU is busy, and a
        # 1 B/elem writeback instead of a separate full-f32 XLA pass in the wrapper.
        sign_ref[...] = jnp.where(acc > 0.0, 1.0,
                                  jnp.where(acc < 0.0, -1.0, 0.0)).astype(jnp.int8)


# ------------------------- generation-aware tiling ---------------------------
def _chip_tiling_config():
    """Tile caps / VMEM budget per TPU generation (conservative when unknown)."""
    kind = ""
    try:
        kind = jax.devices()[0].device_kind.lower()
    except Exception:
        pass
    if "v6" in kind:          # v6e: 128 MiB VMEM, 32 MiB scoped default
        return dict(budget=26 << 20, max_tp=2048, max_tn=512)
    if "v7" in kind or "7x" in kind:   # v7x: 64 MiB per TC, 32 MiB scoped default
        return dict(budget=20 << 20, max_tp=1024, max_tn=512)
    # v5e (16 MiB scoped default) and unknown chips: stay small and safe.
    return dict(budget=10 << 20, max_tp=512, max_tn=512)


def _vmem_bytes(tp, tn, tk):
    """Double-buffered VMEM footprint of one pipeline step (no scratch)."""
    per_step = (tp * tk * 2      # bf16 patches tile
                + tk * tn * 2    # bf16 weight tile
                + tn * 4         # f32 bias row
                + tp * tn * 4    # f32 value output tile (accumulator)
                + tp * tn * 4    # f32 log output tile
                + tp * tn * 1)   # int8 sign output tile
    return 2 * per_step


def _select_tiling(P, K, Cout, cfg):
    budget, max_tp, max_tn = cfg["budget"], cfg["max_tp"], cfg["max_tn"]

    # --- K tile: minimize zero-padding (avoid the round_up(.,512) inflation). ---
    K128 = _round_up(K, 128)
    if K128 <= 768:
        tk = K128                                   # single / few K steps, no extra pad
    else:
        tk = min((512, 384, 256, 128),
                 key=lambda t: (_round_up(K128, t), -t))
    k_pad = _round_up(K128, tk)

    # --- Cout tile: lane-dense, as wide as the chip's MXU likes, minimal pad. ---
    c128 = _round_up(Cout, 128)
    if c128 <= max_tn:
        tn = c128
    else:
        cands = tuple(t for t in (512, 384, 256, 128) if t <= max_tn)
        tn = min(cands, key=lambda t: (_round_up(c128, t), -t))
    c_pad = _round_up(c128, tn)

    # --- P tile: as tall as the VMEM budget allows (multiple of 32 so f32/bf16/i8
    #     sublane tilings are all satisfied). ---
    tp = min(max_tp, _round_up(P, 32))
    while _vmem_bytes(tp, tn, tk) > budget and tp > 256:
        tp = max(256, (tp // 2) // 32 * 32)
    p_pad = _round_up(P, tp)

    return tp, tn, tk, p_pad, c_pad, k_pad


# ------------------------------ JAX wrapper ----------------------------------
def _im2col(x, kh, kw, stride, padding, dilation):
    """NCHW input -> (N*OH*OW, C*KH*KW) patches (plain-JAX glue)."""
    # TODO(synk): fold the KH*KW window gather into the kernel (NHWC row-window
    # index_map / manual DMA) to remove the ~KH*KW HBM read amplification and the
    # patches transpose; for now only the matmul + LNS epilogue run in Pallas.
    N, C, H, W = x.shape
    xp = jnp.pad(x, ((0, 0), (0, 0),
                     (padding[0], padding[0]), (padding[1], padding[1])))
    oh = (H + 2 * padding[0] - dilation[0] * (kh - 1) - 1) // stride[0] + 1
    ow = (W + 2 * padding[1] - dilation[1] * (kw - 1) - 1) // stride[1] + 1
    cols = []
    for i in range(kh):
        for j in range(kw):
            hi, wj = i * dilation[0], j * dilation[1]
            cols.append(xp[:, :,
                           hi:hi + stride[0] * oh:stride[0],
                           wj:wj + stride[1] * ow:stride[1]])     # (N,C,oh,ow)
    cols = jnp.stack(cols, axis=2)                                # (N,C,KH*KW,oh,ow)
    patches = cols.transpose(0, 3, 4, 1, 2).reshape(N * oh * ow, C * kh * kw)
    return patches, oh, ow


def lns_conv2d(x, weight, bias=None, *, stride=(1, 1), padding=(0, 0),
               dilation=(1, 1), groups=1, base=2.0):
    """Forward of LNSConv2d.

    Returns (output_float, output_lns_log, output_lns_sign):
      output_float : f32  (N, Cout, OH, OW)
      output_lns_log: f32 (N, Cout, OH, OW)  = log_base(|output_float|)
      output_lns_sign: int8 (N, Cout, OH, OW) in {-1, 0, +1}
    """
    assert groups == 1, "TODO(synk): groups > 1 not implemented (module default is 1)"
    N, Cin, H, W = x.shape
    Cout, Cin_w, KH, KW = weight.shape
    assert Cin == Cin_w

    log_base = math.log(base)

    # The input LNSTensor(x).to_float() round-trip is algebraically the identity
    # (the log_base factors cancel), so it is elided: no pre-kernel log/exp pass.

    # bf16 matmul inputs (f32 accumulation in the kernel).
    x_bf = x.astype(jnp.bfloat16)
    w_bf = weight.astype(jnp.bfloat16)

    patches, OH, OW = _im2col(x_bf, KH, KW, stride, padding, dilation)  # (P, K) bf16
    wmat = w_bf.reshape(Cout, Cin * KH * KW).T                          # (K, Cout) bf16
    if bias is None:
        bias = jnp.zeros((Cout,), jnp.float32)
    brow = bias.reshape(1, Cout).astype(jnp.float32)

    P, K = patches.shape

    cfg = _chip_tiling_config()
    TILE_P, TILE_N, TILE_K, P_pad, Cout_pad, K_pad = _select_tiling(P, K, Cout, cfg)

    patches_p = jnp.pad(patches, ((0, P_pad - P), (0, K_pad - K)))
    wmat_p = jnp.pad(wmat, ((0, K_pad - K), (0, Cout_pad - Cout)))
    brow_p = jnp.pad(brow, ((0, 0), (0, Cout_pad - Cout)))

    grid = (P_pad // TILE_P, Cout_pad // TILE_N, K_pad // TILE_K)
    kernel = partial(_lns_conv_kernel, inv_log_base=1.0 / log_base)

    # NOTE: if profiling shows DMA still partially exposed at these tile sizes, the
    # patches spec can be bumped to pipeline_mode=pl.Buffered(3).
    out_flat, log_flat, sign_flat = pl.pallas_call(
        kernel,
        out_shape=(
            jax.ShapeDtypeStruct((P_pad, Cout_pad), jnp.float32),
            jax.ShapeDtypeStruct((P_pad, Cout_pad), jnp.float32),
            jax.ShapeDtypeStruct((P_pad, Cout_pad), jnp.int8),
        ),
        grid_spec=pltpu.PrefetchScalarGridSpec(
            num_scalar_prefetch=0,
            grid=grid,
            in_specs=[
                pl.BlockSpec((TILE_P, TILE_K), lambda i, j, k: (i, k)),
                pl.BlockSpec((TILE_K, TILE_N), lambda i, j, k: (k, j)),
                pl.BlockSpec((1, TILE_N), lambda i, j, k: (0, j)),
            ],
            out_specs=(
                pl.BlockSpec((TILE_P, TILE_N), lambda i, j, k: (i, j)),
                pl.BlockSpec((TILE_P, TILE_N), lambda i, j, k: (i, j)),
                pl.BlockSpec((TILE_P, TILE_N), lambda i, j, k: (i, j)),
            ),
        ),
        compiler_params=pltpu.CompilerParams(
            dimension_semantics=("parallel", "parallel", "arbitrary"),
            vmem_limit_bytes=32 << 20),
    )(patches_p, wmat_p, brow_p)

    # TODO(synk): if the consumer accepts NHWC/channels-last, skip these transposes
    # (each is a full HBM read+write pass over the output).
    def to_nchw(a):
        return a[:P, :Cout].reshape(N, OH, OW, Cout).transpose(0, 3, 1, 2)

    out_f = to_nchw(out_flat)
    out_log = to_nchw(log_flat)
    out_sign = to_nchw(sign_flat)          # int8, produced in-kernel (no extra f32 pass)
    return out_f, out_log, out_sign


# ----------------------- deterministic parameter init ------------------------
def init_params(key, in_channels, out_channels, kernel_size):
    kh, kw = kernel_size
    fan_in = in_channels * kh * kw
    # kaiming_uniform_(a=sqrt(5)) -> bound = sqrt(1/fan_in)
    w_bound = math.sqrt(1.0 / fan_in)
    b_bound = 1.0 / math.sqrt(fan_in)
    kw_key, kb_key = jax.random.split(key)
    weight = jax.random.uniform(kw_key, (out_channels, in_channels, kh, kw),
                                jnp.float32, -w_bound, w_bound)
    bias = jax.random.uniform(kb_key, (out_channels,), jnp.float32,
                              -b_bound, b_bound)
    return weight, bias


def _conv_ref(x, w, b, stride, padding, dilation, *, quantize_bf16):
    """XLA reference conv (optionally on the same bf16-rounded inputs)."""
    if quantize_bf16:
        x = x.astype(jnp.bfloat16).astype(jnp.float32)
        w = w.astype(jnp.bfloat16).astype(jnp.float32)
    out = lax.conv_general_dilated(
        x, w, window_strides=stride,
        padding=[(padding[0], padding[0]), (padding[1], padding[1])],
        rhs_dilation=dilation,
        dimension_numbers=("NCHW", "OIHW", "NCHW"),
        precision=lax.Precision.HIGHEST)
    return out + b.reshape(1, -1, 1, 1)


if __name__ == "__main__":
    key = jax.random.PRNGKey(0)

    cases = [
        # (N, Cin, H,  W,  Cout, ksize,  stride,  padding, dilation, base)
        (2, 4, 16, 16, 8, (3, 3), (1, 1), (1, 1), (1, 1), 2.0),
        (1, 3, 14, 14, 5, (3, 3), (2, 2), (0, 1), (1, 1), math.e),
    ]

    for idx, (N, Cin, H, W, Cout, ks, stride, padding, dilation, base) in enumerate(cases):
        key, xk, pk = jax.random.split(key, 3)
        x = jax.random.normal(xk, (N, Cin, H, W), jnp.float32)
        weight, bias = init_params(pk, Cin, Cout, ks)

        out_f, out_log, out_sign = lns_conv2d(
            x, weight, bias, stride=stride, padding=padding,
            dilation=dilation, base=base)
        jax.block_until_ready((out_f, out_log, out_sign))

        # Tight check: XLA f32 conv on the same bf16-rounded inputs (the kernel's
        # MXU products are exact for bf16 inputs, accumulation is f32).
        ref_bf = _conv_ref(x, weight, bias, stride, padding, dilation,
                           quantize_bf16=True)
        assert out_f.shape == ref_bf.shape
        assert jnp.allclose(out_f, ref_bf, atol=1e-4, rtol=1e-4), (
            f"case {idx}: max err {float(jnp.max(jnp.abs(out_f - ref_bf)))}")

        # Loose check vs the pure-f32 conv (only bf16 input quantization noise).
        ref_f32 = _conv_ref(x, weight, bias, stride, padding, dilation,
                            quantize_bf16=False)
        assert jnp.allclose(out_f, ref_f32, atol=5e-2, rtol=5e-2)

        # The LNS (sign, log) representation reconstructs the float conv output.
        recon = out_sign.astype(jnp.float32) * jnp.power(base, out_log)
        assert jnp.allclose(recon, out_f, atol=1e-4, rtol=1e-4)

        # Sign channel matches jnp.sign of the float output.
        assert jnp.array_equal(out_sign.astype(jnp.float32), jnp.sign(out_f))

    print("KERNEL_OK")
</pallas_src>

<mosaic_0001>
module attributes {stable_mosaic.version = 11 : i64} {
  func.func @_lns_conv_kernel(%arg0: i32, %arg1: i32, %arg2: i32, %arg3: memref<512x128xbf16, #tpu.memory_space<vmem>>, %arg4: memref<128x128xbf16, #tpu.memory_space<vmem>>, %arg5: memref<1x128xf32, #tpu.memory_space<vmem>>, %arg6: memref<512x128xf32, #tpu.memory_space<vmem>>, %arg7: memref<512x128xf32, #tpu.memory_space<vmem>>, %arg8: memref<512x128xi8, #tpu.memory_space<vmem>>) attributes {dimension_semantics = [#tpu.dimension_semantics<parallel>, #tpu.dimension_semantics<parallel>, #tpu.dimension_semantics<arbitrary>], iteration_bounds = array<i64: 1, 1, 1>, scalar_prefetch = 0 : i64, scratch_operands = 0 : i64, tpu.core_type = #tpu.core_type<tc>, window_params = [{transform_indices = @transform_0, window_bounds = array<i64: 512, 128>}, {transform_indices = @transform_1, window_bounds = array<i64: 128, 128>}, {transform_indices = @transform_2, window_bounds = array<i64: 1, 128>}, {transform_indices = @transform_3, window_bounds = array<i64: 512, 128>}, {transform_indices = @transform_4, window_bounds = array<i64: 512, 128>}, {transform_indices = @transform_5, window_bounds = array<i64: 512, 128>}]} {
    %c0_i32 = arith.constant 0 : i32
    %0 = arith.cmpi eq, %arg2, %c0_i32 : i32
    %1 = arith.extui %0 : i1 to i32
    %c0_i32_0 = arith.constant 0 : i32
    %2 = arith.cmpi ne, %1, %c0_i32_0 : i32
    scf.if %2 {
      %cst_10 = arith.constant 0.000000e+00 : f32
      %12 = vector.broadcast %cst_10 : f32 to vector<512x128xf32>
      %c0_11 = arith.constant 0 : index
      %c0_12 = arith.constant 0 : index
      %13 = vector.load %arg6[%c0_11, %c0_12] : memref<512x128xf32, #tpu.memory_space<vmem>>, vector<512x128xf32>
      tpu.vector_store %arg6[%c0_11, %c0_12], %12 {strides = array<i32>} : memref<512x128xf32, #tpu.memory_space<vmem>>, vector<512x128xf32>,
    } else {
    }
    %c0 = arith.constant 0 : index
    %c0_1 = arith.constant 0 : index
    %3 = vector.load %arg6[%c0, %c0_1] : memref<512x128xf32, #tpu.memory_space<vmem>>, vector<512x128xf32>
    %c0_2 = arith.constant 0 : index
    %c0_3 = arith.constant 0 : index
    %4 = vector.load %arg3[%c0_2, %c0_3] : memref<512x128xbf16, #tpu.memory_space<vmem>>, vector<512x128xbf16>
    %c0_4 = arith.constant 0 : index
    %c0_5 = arith.constant 0 : index
    %5 = vector.load %arg4[%c0_4, %c0_5] : memref<128x128xbf16, #tpu.memory_space<vmem>>, vector<128x128xbf16>
    %cst = arith.constant dense<0.000000e+00> : vector<512x128xf32>
    %6 = tpu.matmul %4, %5, %cst {dimension_numbers = #tpu.dot_dimension_numbers<[1], [0], [0], [1], [0, 0, 1, 1], [], []>} : vector<512x128xbf16>, vector<128x128xbf16>, vector<512x128xf32> -> vector<512x128xf32>
    %7 = arith.addf %3, %6 : vector<512x128xf32>
    %c0_6 = arith.constant 0 : index
    %c0_7 = arith.constant 0 : index
    %8 = vector.load %arg6[%c0_6, %c0_7] : memref<512x128xf32, #tpu.memory_space<vmem>>, vector<512x128xf32>
    tpu.vector_store %arg6[%c0_6, %c0_7], %7 {strides = array<i32>} : memref<512x128xf32, #tpu.memory_space<vmem>>, vector<512x128xf32>,
    %c0_i32_8 = arith.constant 0 : i32
    %9 = arith.cmpi eq, %arg2, %c0_i32_8 : i32
    %10 = arith.extui %9 : i1 to i32
    %c0_i32_9 = arith.constant 0 : i32
    %11 = arith.cmpi ne, %10, %c0_i32_9 : i32
    scf.if %11 {
      %c0_10 = arith.constant 0 : index
      %c0_11 = arith.constant 0 : index
      %12 = vector.load %arg6[%c0_10, %c0_11] : memref<512x128xf32, #tpu.memory_space<vmem>>, vector<512x128xf32>
      %c0_12 = arith.constant 0 : index
      %c0_13 = arith.constant 0 : index
      %13 = vector.load %arg5[%c0_12, %c0_13] : memref<1x128xf32, #tpu.memory_space<vmem>>, vector<1x128xf32>
      %14 = vector.broadcast %13 : vector<1x128xf32> to vector<512x128xf32>
      %15 = arith.addf %12, %14 : vector<512x128xf32>
      %c0_14 = arith.constant 0 : index
      %c0_15 = arith.constant 0 : index
      %16 = vector.load %arg6[%c0_14, %c0_15] : memref<512x128xf32, #tpu.memory_space<vmem>>, vector<512x128xf32>
      tpu.vector_store %arg6[%c0_14, %c0_15], %15 {strides = array<i32>} : memref<512x128xf32, #tpu.memory_space<vmem>>, vector<512x128xf32>,
      %17 = math.absf %15 : vector<512x128xf32>
      %18 = math.log %17 : vector<512x128xf32>
      %cst_16 = arith.constant 1.44269502 : f32
      %19 = vector.broadcast %cst_16 : f32 to vector<512x128xf32>
      %20 = arith.mulf %18, %19 : vector<512x128xf32>
      %c0_17 = arith.constant 0 : index
      %c0_18 = arith.constant 0 : index
      %21 = vector.load %arg7[%c0_17, %c0_18] : memref<512x128xf32, #tpu.memory_space<vmem>>, vector<512x128xf32>
      tpu.vector_store %arg7[%c0_17, %c0_18], %20 {strides = array<i32>} : memref<512x128xf32, #tpu.memory_space<vmem>>, vector<512x128xf32>,
      %cst_19 = arith.constant 0.000000e+00 : f32
      %22 = vector.broadcast %cst_19 : f32 to vector<512x128xf32>
      %23 = arith.cmpf ogt, %15, %22 : vector<512x128xf32>
      %cst_20 = arith.constant 0.000000e+00 : f32
      %24 = vector.broadcast %cst_20 : f32 to vector<512x128xf32>
      %25 = arith.cmpf olt, %15, %24 : vector<512x128xf32>
      %cst_21 = arith.constant -1.000000e+00 : f32
      %cst_22 = arith.constant 0.000000e+00 : f32
      %26 = vector.broadcast %cst_21 : f32 to vector<512x128xf32>
      %27 = vector.broadcast %cst_22 : f32 to vector<512x128xf32>
      %28 = arith.select %25, %26, %27 : vector<512x128xi1>, vector<512x128xf32>
      %cst_23 = arith.constant 1.000000e+00 : f32
      %29 = vector.broadcast %cst_23 : f32 to vector<512x128xf32>
      %30 = arith.select %23, %29, %28 : vector<512x128xi1>, vector<512x128xf32>
      %31 = arith.fptosi %30 : vector<512x128xf32> to vector<512x128xi8>
      %c0_24 = arith.constant 0 : index
      %c0_25 = arith.constant 0 : index
      %32 = vector.load %arg8[%c0_24, %c0_25] : memref<512x128xi8, #tpu.memory_space<vmem>>, vector<512x128xi8>
      tpu.vector_store %arg8[%c0_24, %c0_25], %31 {strides = array<i32>} : memref<512x128xi8, #tpu.memory_space<vmem>>, vector<512x128xi8>,
    } else {
    }
    return
  }
  func.func @transform_0(%arg0: i32, %arg1: i32, %arg2: i32) -> (i32, i32) {
    %c0_i32 = arith.constant 0 : i32
    return %arg0, %arg2 : i32, i32
  }
  func.func @transform_1(%arg0: i32, %arg1: i32, %arg2: i32) -> (i32, i32) {
    %c0_i32 = arith.constant 0 : i32
    return %arg2, %arg1 : i32, i32
  }
  func.func @transform_2(%arg0: i32, %arg1: i32, %arg2: i32) -> (i32, i32) {
    %c0_i32 = arith.constant 0 : i32
    %c0_i32_0 = arith.constant 0 : i32
    return %c0_i32, %arg1 : i32, i32
  }
  func.func @transform_3(%arg0: i32, %arg1: i32, %arg2: i32) -> (i32, i32) {
    %c0_i32 = arith.constant 0 : i32
    return %arg0, %arg1 : i32, i32
  }
  func.func @transform_4(%arg0: i32, %arg1: i32, %arg2: i32) -> (i32, i32) {
    %c0_i32 = arith.constant 0 : i32
    return %arg0, %arg1 : i32, i32
  }
  func.func @transform_5(%arg0: i32, %arg1: i32, %arg2: i32) -> (i32, i32) {
    %c0_i32 = arith.constant 0 : i32
    return %arg0, %arg1 : i32, i32
  }
}

</mosaic_0001>

<llo_original>
// kernel: tpu_custom_call.1
$region0: #{tpu_custom_call.1}
  #allocation0 [shape = 'u32[]', space=smem, size = 0x4, offset = 0x4, fixed_abs, tag = 'smem constant byte address 0x4 - core index']
  #allocation1 [shape = 'u32[144,128]{1,0:T(1,128)}', space=vmem, size = 0x12000, scoped, tag = 'internal scratch']
  %s0 = inlined_call_operand.hbm [shape: bf16[512,128], index: 0, kind: input, shape index: {}]
  %s1 = inlined_call_operand.hbm [shape: bf16[128,128], index: 1, kind: input, shape index: {}]
  %s2 = inlined_call_operand.vmem [shape: f32[1,128], index: 2, kind: input, shape index: {}]
  %s3 = inlined_call_operand.hbm [shape: f32[512,128], index: 3, kind: output, shape index: {0}]
  %s4 = inlined_call_operand.hbm [shape: f32[512,128], index: 4, kind: output, shape index: {1}]
  %s5 = inlined_call_operand.hbm [shape: s8[512,128], index: 5, kind: output, shape index: {2}]
  %6 = xla_tuple %s3, %s4, %s5
  %s7 = sld [smem:[#allocation0]]
  $region54: #{tpu_custom_call.1} parent=0
    _
  %s9 = ssub.s32 1, %s7
  %s10 = scalar_select 0, %s9, %s7
  $region1: #{tpu_custom_call.1} parent=0
    #allocation2 [shape = 'u8[131072]{0}', space=vmem, size = 0x20000, scoped, tag = 'input window, operand 0, single buffered']
    #allocation3 [shape = 's32[1]{0}', space=sflag, size = 0x4, scoped, tag = 'scoped memory for tpu_custom_call.1']
    #allocation4 [shape = 's32[1]{0}', space=sflag, size = 0x4, scoped, tag = 'scoped memory for tpu_custom_call.1']
    #allocation5 [shape = 'u8[32768]{0}', space=vmem, size = 0x8000, scoped, tag = 'input window, operand 1, single buffered']
    #allocation6 [shape = 's32[1]{0}', space=sflag, size = 0x4, scoped, tag = 'scoped memory for tpu_custom_call.1']
    #allocation7 [shape = 'u8[262144]{0}', space=vmem, size = 0x40000, scoped, tag = 'output window, operand 0, single buffered']
    #allocation8 [shape = 'u8[262144]{0}', space=vmem, size = 0x40000, scoped, tag = 'output window, operand 1, single buffered']
    #allocation9 [shape = 's32[1]{0}', space=sflag, size = 0x4, scoped, tag = 'scoped memory for tpu_custom_call.1']
    #allocation10 [shape = 'u8[65536]{0}', space=vmem, size = 0x10000, scoped, tag = 'output window, operand 2, single buffered']
    %11 = vsyncpa [#allocation3], 0
    %12 = vsyncpa [#allocation6], 0
    %13 = vsyncpa [#allocation4], 0
    %14 = vsyncpa [#allocation9], 0
    // Predicated region
    $region2: #{tpu_custom_call.1} parent=1 // pred_check
      _
    $region3: #{tpu_custom_call.1} parent=1 // pred_check_branch
      %16 = sbr.rel (0) target = $region5
    $region4: #{tpu_custom_call.1} parent=1 // pred_region
      %s18 = ssub.s32 4096, 4096
      %19 = vsyncadd [#allocation3], %s18
      %s20 = sshll.u32 [#allocation2], 4
      %s21 = int_to_ptr.vmem [resolvable:$true] %s20
      %26 = dma.hbm_to_vmem [thread:$0]  %s0, 4096, %s21, [#allocation3], 64, 64, 4
    $region5: #{tpu_custom_call.1} parent=1 // pred_fallthru
      _
    // Predicated region
    $region6: #{tpu_custom_call.1} parent=1 // pred_check
      _
    $region7: #{tpu_custom_call.1} parent=1 // pred_check_branch
      %28 = sbr.rel (0) target = $region9
    $region8: #{tpu_custom_call.1} parent=1 // pred_region
      %s30 = ssub.s32 1024, 1024
      %31 = vsyncadd [#allocation6], %s30
      %s32 = sshll.u32 [#allocation5], 4
      %s33 = int_to_ptr.vmem [resolvable:$true] %s32
      %38 = dma.hbm_to_vmem [thread:$0]  %s1, 1024, %s33, [#allocation6], 64, 64, 4
    $region9: #{tpu_custom_call.1} parent=1 // pred_fallthru
      _
    // Predicated region
    $region10: #{tpu_custom_call.1} parent=1 // pred_check
      _
    $region11: #{tpu_custom_call.1} parent=1 // pred_check_branch
      %40 = sbr.rel (0) target = $region13
    $region12: #{tpu_custom_call.1} parent=1 // pred_region
      _
    $region13: #{tpu_custom_call.1} parent=1 // pred_fallthru
      _
    // Predicated region
    $region14: #{tpu_custom_call.1} parent=1 // pred_check
      _
    $region15: #{tpu_custom_call.1} parent=1 // pred_check_branch
      %42 = sbr.rel (0) target = $region17
    $region16: #{tpu_custom_call.1} parent=1 // pred_region
      %43 = dma.done [#allocation3], 4096
    $region17: #{tpu_custom_call.1} parent=1 // pred_fallthru
      _
    // Predicated region
    $region18: #{tpu_custom_call.1} parent=1 // pred_check
      _
    $region19: #{tpu_custom_call.1} parent=1 // pred_check_branch
      %45 = sbr.rel (0) target = $region21
    $region20: #{tpu_custom_call.1} parent=1 // pred_region
      %46 = dma.done [#allocation6], 1024
    $region21: #{tpu_custom_call.1} parent=1 // pred_fallthru
      _
    %p48 = scmp.eq.s32.totalorder 0, 0
    // Predicated region
    $region22: #{tpu_custom_call.1} parent=1 // pred_check
      %p49 = pneg %p48
    $region23: #{tpu_custom_call.1} parent=1 // pred_check_branch
      %51 = sbr.rel (%p49) target = $region25
    $region24: #{tpu_custom_call.1} parent=1 // pred_region
      %52 = vst [vmem:[#allocation7] sm:$0xff] 0.0
      %53 = vst [vmem:[#allocation7 + $0x8] sm:$0xff] 0.0
      %54 = vst [vmem:[#allocation7 + $0x10] sm:$0xff] 0.0
      %55 = vst [vmem:[#allocation7 + $0x18] sm:$0xff] 0.0
      %56 = vst [vmem:[#allocation7 + $0x20] sm:$0xff] 0.0
      %57 = vst [vmem:[#allocation7 + $0x28] sm:$0xff] 0.0
      %58 = vst [vmem:[#allocation7 + $0x30] sm:$0xff] 0.0
      %59 = vst [vmem:[#allocation7 + $0x38] sm:$0xff] 0.0
      %60 = vst [vmem:[#allocation7 + $0x40] sm:$0xff] 0.0
      %61 = vst [vmem:[#allocation7 + $0x48] sm:$0xff] 0.0
      %62 = vst [vmem:[#allocation7 + $0x50] sm:$0xff] 0.0
      %63 = vst [vmem:[#allocation7 + $0x58] sm:$0xff] 0.0
      %64 = vst [vmem:[#allocation7 + $0x60] sm:$0xff] 0.0
      %65 = vst [vmem:[#allocation7 + $0x68] sm:$0xff] 0.0
      %66 = vst [vmem:[#allocation7 + $0x70] sm:$0xff] 0.0
      %67 = vst [vmem:[#allocation7 + $0x78] sm:$0xff] 0.0
      %68 = vst [vmem:[#allocation7 + $0x80] sm:$0xff] 0.0
      %69 = vst [vmem:[#allocation7 + $0x88] sm:$0xff] 0.0
      %70 = vst [vmem:[#allocation7 + $0x90] sm:$0xff] 0.0
      %71 = vst [vmem:[#allocation7 + $0x98] sm:$0xff] 0.0
      %72 = vst [vmem:[#allocation7 + $0xa0] sm:$0xff] 0.0
      %73 = vst [vmem:[#allocation7 + $0xa8] sm:$0xff] 0.0
      %74 = vst [vmem:[#allocation7 + $0xb0] sm:$0xff] 0.0
      %75 = vst [vmem:[#allocation7 + $0xb8] sm:$0xff] 0.0
      %76 = vst [vmem:[#allocation7 + $0xc0] sm:$0xff] 0.0
      %77 = vst [vmem:[#allocation7 + $0xc8] sm:$0xff] 0.0
      %78 = vst [vmem:[#allocation7 + $0xd0] sm:$0xff] 0.0
      %79 = vst [vmem:[#allocation7 + $0xd8] sm:$0xff] 0.0
      %80 = vst [vmem:[#allocation7 + $0xe0] sm:$0xff] 0.0
      %81 = vst [vmem:[#allocation7 + $0xe8] sm:$0xff] 0.0
      %82 = vst [vmem:[#allocation7 + $0xf0] sm:$0xff] 0.0
      %83 = vst [vmem:[#allocation7 + $0xf8] sm:$0xff] 0.0
      %84 = vst [vmem:[#allocation7 + $0x100] sm:$0xff] 0.0
      %85 = vst [vmem:[#allocation7 + $0x108] sm:$0xff] 0.0
      %86 = vst [vmem:[#allocation7 + $0x110] sm:$0xff] 0.0
      %87 = vst [vmem:[#allocation7 + $0x118] sm:$0xff] 0.0
      %88 = vst [vmem:[#allocation7 + $0x120] sm:$0xff] 0.0
      %89 = vst [vmem:[#allocation7 + $0x128] sm:$0xff] 0.0
      %90 = vst [vmem:[#allocation7 + $0x130] sm:$0xff] 0.0
      %91 = vst [vmem:[#allocation7 + $0x138] sm:$0xff] 0.0
      %92 = vst [vmem:[#allocation7 + $0x140] sm:$0xff] 0.0
      %93 = vst [vmem:[#allocation7 + $0x148] sm:$0xff] 0.0
      %94 = vst [vmem:[#allocation7 + $0x150] sm:$0xff] 0.0
      %95 = vst [vmem:[#allocation7 + $0x158] sm:$0xff] 0.0
      %96 = vst [vmem:[#allocation7 + $0x160] sm:$0xff] 0.0
      %97 = vst [vmem:[#allocation7 + $0x168] sm:$0xff] 0.0
      %98 = vst [vmem:[#allocation7 + $0x170] sm:$0xff] 0.0
      %99 = vst [vmem:[#allocation7 + $0x178] sm:$0xff] 0.0
      %100 = vst [vmem:[#allocation7 + $0x180] sm:$0xff] 0.0
      %101 = vst [vmem:[#allocation7 + $0x188] sm:$0xff] 0.0
      %102 = vst [vmem:[#allocation7 + $0x190] sm:$0xff] 0.0
      %103 = vst [vmem:[#allocation7 + $0x198] sm:$0xff] 0.0
      %104 = vst [vmem:[#allocation7 + $0x1a0] sm:$0xff] 0.0
      %105 = vst [vmem:[#allocation7 + $0x1a8] sm:$0xff] 0.0
      %106 = vst [vmem:[#allocation7 + $0x1b0] sm:$0xff] 0.0
      %107 = vst [vmem:[#allocation7 + $0x1b8] sm:$0xff] 0.0
      %108 = vst [vmem:[#allocation7 + $0x1c0] sm:$0xff] 0.0
      %109 = vst [vmem:[#allocation7 + $0x1c8] sm:$0xff] 0.0
      %110 = vst [vmem:[#allocation7 + $0x1d0] sm:$0xff] 0.0
      %111 = vst [vmem:[#allocation7 + $0x1d8] sm:$0xff] 0.0
      %112 = vst [vmem:[#allocation7 + $0x1e0] sm:$0xff] 0.0
      %113 = vst [vmem:[#allocation7 + $0x1e8] sm:$0xff] 0.0
      %114 = vst [vmem:[#allocation7 + $0x1f0] sm:$0xff] 0.0
      %115 = vst [vmem:[#allocation7 + $0x1f8] sm:$0xff] 0.0
    $region25: #{tpu_custom_call.1} parent=1 // pred_fallthru
      _
    %v116 = vld [vmem:[#allocation7] sm:$0xff]
    %v117 = vld [vmem:[#allocation7 + $0x8] sm:$0xff]
    %v118 = vld [vmem:[#allocation7 + $0x10] sm:$0xff]
    %v119 = vld [vmem:[#allocation7 + $0x18] sm:$0xff]
    %v120 = vld [vmem:[#allocation7 + $0x20] sm:$0xff]
    %v121 = vld [vmem:[#allocation7 + $0x28] sm:$0xff]
    %v122 = vld [vmem:[#allocation7 + $0x30] sm:$0xff]
    %v123 = vld [vmem:[#allocation7 + $0x38] sm:$0xff]
    %v124 = vld [vmem:[#allocation7 + $0x40] sm:$0xff]
    %v125 = vld [vmem:[#allocation7 + $0x48] sm:$0xff]
    %v126 = vld [vmem:[#allocation7 + $0x50] sm:$0xff]
    %v127 = vld [vmem:[#allocation7 + $0x58] sm:$0xff]
    %v128 = vld [vmem:[#allocation7 + $0x60] sm:$0xff]
    %v129 = vld [vmem:[#allocation7 + $0x68] sm:$0xff]
    %v130 = vld [vmem:[#allocation7 + $0x70] sm:$0xff]
    %v131 = vld [vmem:[#allocation7 + $0x78] sm:$0xff]
    %v132 = vld [vmem:[#allocation7 + $0x80] sm:$0xff]
    %v133 = vld [vmem:[#allocation7 + $0x88] sm:$0xff]
    %v134 = vld [vmem:[#allocation7 + $0x90] sm:$0xff]
    %v135 = vld [vmem:[#allocation7 + $0x98] sm:$0xff]
    %v136 = vld [vmem:[#allocation7 + $0xa0] sm:$0xff]
    %v137 = vld [vmem:[#allocation7 + $0xa8] sm:$0xff]
    %v138 = vld [vmem:[#allocation7 + $0xb0] sm:$0xff]
    %v139 = vld [vmem:[#allocation7 + $0xb8] sm:$0xff]
    %v140 = vld [vmem:[#allocation7 + $0xc0] sm:$0xff]
    %v141 = vld [vmem:[#allocation7 + $0xc8] sm:$0xff]
    %v142 = vld [vmem:[#allocation7 + $0xd0] sm:$0xff]
    %v143 = vld [vmem:[#allocation7 + $0xd8] sm:$0xff]
    %v144 = vld [vmem:[#allocation7 + $0xe0] sm:$0xff]
    %v145 = vld [vmem:[#allocation7 + $0xe8] sm:$0xff]
    %v146 = vld [vmem:[#allocation7 + $0xf0] sm:$0xff]
    %v147 = vld [vmem:[#allocation7 + $0xf8] sm:$0xff]
    %v148 = vld [vmem:[#allocation7 + $0x100] sm:$0xff]
    %v149 = vld [vmem:[#allocation7 + $0x108] sm:$0xff]
    %v150 = vld [vmem:[#allocation7 + $0x110] sm:$0xff]
    %v151 = vld [vmem:[#allocation7 + $0x118] sm:$0xff]
    %v152 = vld [vmem:[#allocation7 + $0x120] sm:$0xff]
    %v153 = vld [vmem:[#allocation7 + $0x128] sm:$0xff]
    %v154 = vld [vmem:[#allocation7 + $0x130] sm:$0xff]
    %v155 = vld [vmem:[#allocation7 + $0x138] sm:$0xff]
    %v156 = vld [vmem:[#allocation7 + $0x140] sm:$0xff]
    %v157 = vld [vmem:[#allocation7 + $0x148] sm:$0xff]
    %v158 = vld [vmem:[#allocation7 + $0x150] sm:$0xff]
    %v159 = vld [vmem:[#allocation7 + $0x158] sm:$0xff]
    %v160 = vld [vmem:[#allocation7 + $0x160] sm:$0xff]
    %v161 = vld [vmem:[#allocation7 + $0x168] sm:$0xff]
    %v162 = vld [vmem:[#allocation7 + $0x170] sm:$0xff]
    %v163 = vld [vmem:[#allocation7 + $0x178] sm:$0xff]
    %v164 = vld [vmem:[#allocation7 + $0x180] sm:$0xff]
    %v165 = vld [vmem:[#allocation7 + $0x188] sm:$0xff]
    %v166 = vld [vmem:[#allocation7 + $0x190] sm:$0xff]
    %v167 = vld [vmem:[#allocation7 + $0x198] sm:$0xff]
    %v168 = vld [vmem:[#allocation7 + $0x1a0] sm:$0xff]
    %v169 = vld [vmem:[#allocation7 + $0x1a8] sm:$0xff]
    %v170 = vld [vmem:[#allocation7 + $0x1b0] sm:$0xff]
    %v171 = vld [vmem:[#allocation7 + $0x1b8] sm:$0xff]
    %v172 = vld [vmem:[#allocation7 + $0x1c0] sm:$0xff]
    %v173 = vld [vmem:[#allocation7 + $0x1c8] sm:$0xff]
    %v174 = vld [vmem:[#allocation7 + $0x1d0] sm:$0xff]
    %v175 = vld [vmem:[#allocation7 + $0x1d8] sm:$0xff]
    %v176 = vld [vmem:[#allocation7 + $0x1e0] sm:$0xff]
    %v177 = vld [vmem:[#allocation7 + $0x1e8] sm:$0xff]
    %v178 = vld [vmem:[#allocation7 + $0x1f0] sm:$0xff]
    %v179 = vld [vmem:[#allocation7 + $0x1f8] sm:$0xff]
    %v180 = vld [vmem:[#allocation2] sm:$0xf]
    %v181 = vld [vmem:[#allocation2 + $0x4] sm:$0xf]
    %v182 = vld [vmem:[#allocation2 + $0x8] sm:$0xf]
    %v183 = vld [vmem:[#allocation2 + $0xc] sm:$0xf]
    %v184 = vld [vmem:[#allocation2 + $0x10] sm:$0xf]
    %v185 = vld [vmem:[#allocation2 + $0x14] sm:$0xf]
    %v186 = vld [vmem:[#allocation2 + $0x18] sm:$0xf]
    %v187 = vld [vmem:[#allocation2 + $0x1c] sm:$0xf]
    %v188 = vld [vmem:[#allocation2 + $0x20] sm:$0xf]
    %v189 = vld [vmem:[#allocation2 + $0x24] sm:$0xf]
    %v190 = vld [vmem:[#allocation2 + $0x28] sm:$0xf]
    %v191 = vld [vmem:[#allocation2 + $0x2c] sm:$0xf]
    %v192 = vld [vmem:[#allocation2 + $0x30] sm:$0xf]
    %v193 = vld [vmem:[#allocation2 + $0x34] sm:$0xf]
    %v194 = vld [vmem:[#allocation2 + $0x38] sm:$0xf]
    %v195 = vld [vmem:[#allocation2 + $0x3c] sm:$0xf]
    %v196 = vld [vmem:[#allocation2 + $0x40] sm:$0xf]
    %v197 = vld [vmem:[#allocation2 + $0x44] sm:$0xf]
    %v198 = vld [vmem:[#allocation2 + $0x48] sm:$0xf]
    %v199 = vld [vmem:[#allocation2 + $0x4c] sm:$0xf]
    %v200 = vld [vmem:[#allocation2 + $0x50] sm:$0xf]
    %v201 = vld [vmem:[#allocation2 + $0x54] sm:$0xf]
    %v202 = vld [vmem:[#allocation2 + $0x58] sm:$0xf]
    %v203 = vld [vmem:[#allocation2 + $0x5c] sm:$0xf]
    %v204 = vld [vmem:[#allocation2 + $0x60] sm:$0xf]
    %v205 = vld [vmem:[#allocation2 + $0x64] sm:$0xf]
    %v206 = vld [vmem:[#allocation2 + $0x68] sm:$0xf]
    %v207 = vld [vmem:[#allocation2 + $0x6c] sm:$0xf]
    %v208 = vld [vmem:[#allocation2 + $0x70] sm:$0xf]
    %v209 = vld [vmem:[#allocation2 + $0x74] sm:$0xf]
    %v210 = vld [vmem:[#allocation2 + $0x78] sm:$0xf]
    %v211 = vld [vmem:[#allocation2 + $0x7c] sm:$0xf]
    %v212 = vld [vmem:[#allocation2 + $0x80] sm:$0xf]
    %v213 = vld [vmem:[#allocation2 + $0x84] sm:$0xf]
    %v214 = vld [vmem:[#allocation2 + $0x88] sm:$0xf]
    %v215 = vld [vmem:[#allocation2 + $0x8c] sm:$0xf]
    %v216 = vld [vmem:[#allocation2 + $0x90] sm:$0xf]
    %v217 = vld [vmem:[#allocation2 + $0x94] sm:$0xf]
    %v218 = vld [vmem:[#allocation2 + $0x98] sm:$0xf]
    %v219 = vld [vmem:[#allocation2 + $0x9c] sm:$0xf]
    %v220 = vld [vmem:[#allocation2 + $0xa0] sm:$0xf]
    %v221 = vld [vmem:[#allocation2 + $0xa4] sm:$0xf]
    %v222 = vld [vmem:[#allocation2 + $0xa8] sm:$0xf]
    %v223 = vld [vmem:[#allocation2 + $0xac] sm:$0xf]
    %v224 = vld [vmem:[#allocation2 + $0xb0] sm:$0xf]
    %v225 = vld [vmem:[#allocation2 + $0xb4] sm:$0xf]
    %v226 = vld [vmem:[#allocation2 + $0xb8] sm:$0xf]
    %v227 = vld [vmem:[#allocation2 + $0xbc] sm:$0xf]
    %v228 = vld [vmem:[#allocation2 + $0xc0] sm:$0xf]
    %v229 = vld [vmem:[#allocation2 + $0xc4] sm:$0xf]
    %v230 = vld [vmem:[#allocation2 + $0xc8] sm:$0xf]
    %v231 = vld [vmem:[#allocation2 + $0xcc] sm:$0xf]
    %v232 = vld [vmem:[#allocation2 + $0xd0] sm:$0xf]
    %v233 = vld [vmem:[#allocation2 + $0xd4] sm:$0xf]
    %v234 = vld [vmem:[#allocation2 + $0xd8] sm:$0xf]
    %v235 = vld [vmem:[#allocation2 + $0xdc] sm:$0xf]
    %v236 = vld [vmem:[#allocation2 + $0xe0] sm:$0xf]
    %v237 = vld [vmem:[#allocation2 + $0xe4] sm:$0xf]
    %v238 = vld [vmem:[#allocation2 + $0xe8] sm:$0xf]
    %v239 = vld [vmem:[#allocation2 + $0xec] sm:$0xf]
    %v240 = vld [vmem:[#allocation2 + $0xf0] sm:$0xf]
    %v241 = vld [vmem:[#allocation2 + $0xf4] sm:$0xf]
    %v242 = vld [vmem:[#allocation2 + $0xf8] sm:$0xf]
    %v243 = vld [vmem:[#allocation2 + $0xfc] sm:$0xf]
    %v244 = vld [vmem:[#allocation5] sm:$0xf]
    %v245 = vld [vmem:[#allocation5 + $0x4] sm:$0xf]
    %v246 = vld [vmem:[#allocation5 + $0x8] sm:$0xf]
    %v247 = vld [vmem:[#allocation5 + $0xc] sm:$0xf]
    %v248 = vld [vmem:[#allocation5 + $0x10] sm:$0xf]
    %v249 = vld [vmem:[#allocation5 + $0x14] sm:$0xf]
    %v250 = vld [vmem:[#allocation5 + $0x18] sm:$0xf]
    %v251 = vld [vmem:[#allocation5 + $0x1c] sm:$0xf]
    %v252 = vld [vmem:[#allocation5 + $0x20] sm:$0xf]
    %v253 = vld [vmem:[#allocation5 + $0x24] sm:$0xf]
    %v254 = vld [vmem:[#allocation5 + $0x28] sm:$0xf]
    %v255 = vld [vmem:[#allocation5 + $0x2c] sm:$0xf]
    %v256 = vld [vmem:[#allocation5 + $0x30] sm:$0xf]
    %v257 = vld [vmem:[#allocation5 + $0x34] sm:$0xf]
    %v258 = vld [vmem:[#allocation5 + $0x38] sm:$0xf]
    %v259 = vld [vmem:[#allocation5 + $0x3c] sm:$0xf]
    %v324 = vunpack.c.l.b16 %v180
    %v325 = vunpack.c.l.b16 %v181
    %v326 = vunpack.c.l.b16 %v182
    %v327 = vunpack.c.l.b16 %v183
    %v328 = vunpack.c.l.b16 %v184
    %v329 = vunpack.c.l.b16 %v185
    %v330 = vunpack.c.l.b16 %v186
    %v331 = vunpack.c.l.b16 %v187
    %v332 = vunpack.c.l.b16 %v188
    %v333 = vunpack.c.l.b16 %v189
    %v334 = vunpack.c.l.b16 %v190
    %v335 = vunpack.c.l.b16 %v191
    %v336 = vunpack.c.l.b16 %v192
    %v337 = vunpack.c.l.b16 %v193
    %v338 = vunpack.c.l.b16 %v194
    %v339 = vunpack.c.l.b16 %v195
    %v340 = vunpack.c.l.b16 %v196
    %v341 = vunpack.c.l.b16 %v197
    %v342 = vunpack.c.l.b16 %v198
    %v343 = vunpack.c.l.b16 %v199
    %v344 = vunpack.c.l.b16 %v200
    %v345 = vunpack.c.l.b16 %v201
    %v346 = vunpack.c.l.b16 %v202
    %v347 = vunpack.c.l.b16 %v203
    %v348 = vunpack.c.l.b16 %v204
    %v349 = vunpack.c.l.b16 %v205
    %v350 = vunpack.c.l.b16 %v206
    %v351 = vunpack.c.l.b16 %v207
    %v352 = vunpack.c.l.b16 %v208
    %v353 = vunpack.c.l.b16 %v209
    %v354 = vunpack.c.l.b16 %v210
    %v355 = vunpack.c.l.b16 %v211
    %v356 = vunpack.c.l.b16 %v212
    %v357 = vunpack.c.l.b16 %v213
    %v358 = vunpack.c.l.b16 %v214
    %v359 = vunpack.c.l.b16 %v215
    %v360 = vunpack.c.l.b16 %v216
    %v361 = vunpack.c.l.b16 %v217
    %v362 = vunpack.c.l.b16 %v218
    %v363 = vunpack.c.l.b16 %v219
    %v364 = vunpack.c.l.b16 %v220
    %v365 = vunpack.c.l.b16 %v221
    %v366 = vunpack.c.l.b16 %v222
    %v367 = vunpack.c.l.b16 %v223
    %v368 = vunpack.c.l.b16 %v224
    %v369 = vunpack.c.l.b16 %v225
    %v370 = vunpack.c.l.b16 %v226
    %v371 = vunpack.c.l.b16 %v227
    %v372 = vunpack.c.l.b16 %v228
    %v373 = vunpack.c.l.b16 %v229
    %v374 = vunpack.c.l.b16 %v230
    %v375 = vunpack.c.l.b16 %v231
    %v376 = vunpack.c.l.b16 %v232
    %v377 = vunpack.c.l.b16 %v233
    %v378 = vunpack.c.l.b16 %v234
    %v379 = vunpack.c.l.b16 %v235
    %v380 = vunpack.c.l.b16 %v236
    %v381 = vunpack.c.l.b16 %v237
    %v382 = vunpack.c.l.b16 %v238
    %v383 = vunpack.c.l.b16 %v239
    %v384 = vunpack.c.l.b16 %v240
    %v385 = vunpack.c.l.b16 %v241
    %v386 = vunpack.c.l.b16 %v242
    %v387 = vunpack.c.l.b16 %v243
    %v388 = vpack.c.b16 %v325, %v324
    %v389 = vpack.c.b16 %v327, %v326
    %v390 = vpack.c.b16 %v329, %v328
    %v391 = vpack.c.b16 %v331, %v330
    %v392 = vpack.c.b16 %v333, %v332
    %v393 = vpack.c.b16 %v335, %v334
    %v394 = vpack.c.b16 %v337, %v336
    %v395 = vpack.c.b16 %v339, %v338
    %v396 = vpack.c.b16 %v341, %v340
    %v397 = vpack.c.b16 %v343, %v342
    %v398 = vpack.c.b16 %v345, %v344
    %v399 = vpack.c.b16 %v347, %v346
    %v400 = vpack.c.b16 %v349, %v348
    %v401 = vpack.c.b16 %v351, %v350
    %v402 = vpack.c.b16 %v353, %v352
    %v403 = vpack.c.b16 %v355, %v354
    %v404 = vpack.c.b16 %v357, %v356
    %v405 = vpack.c.b16 %v359, %v358
    %v406 = vpack.c.b16 %v361, %v360
    %v407 = vpack.c.b16 %v363, %v362
    %v408 = vpack.c.b16 %v365, %v364
    %v409 = vpack.c.b16 %v367, %v366
    %v410 = vpack.c.b16 %v369, %v368
    %v411 = vpack.c.b16 %v371, %v370
    %v412 = vpack.c.b16 %v373, %v372
    %v413 = vpack.c.b16 %v375, %v374
    %v414 = vpack.c.b16 %v377, %v376
    %v415 = vpack.c.b16 %v379, %v378
    %v416 = vpack.c.b16 %v381, %v380
    %v417 = vpack.c.b16 %v383, %v382
    %v418 = vpack.c.b16 %v385, %v384
    %v419 = vpack.c.b16 %v387, %v386
    %v468 = vunpack.c.l.b16 %v244
    %v469 = vunpack.c.l.b16 %v245
    %v470 = vunpack.c.l.b16 %v246
    %v471 = vunpack.c.l.b16 %v247
    %v472 = vunpack.c.l.b16 %v248
    %v473 = vunpack.c.l.b16 %v249
    %v474 = vunpack.c.l.b16 %v250
    %v475 = vunpack.c.l.b16 %v251
    %v476 = vunpack.c.l.b16 %v252
    %v477 = vunpack.c.l.b16 %v253
    %v478 = vunpack.c.l.b16 %v254
    %v479 = vunpack.c.l.b16 %v255
    %v480 = vunpack.c.l.b16 %v256
    %v481 = vunpack.c.l.b16 %v257
    %v482 = vunpack.c.l.b16 %v258
    %v483 = vunpack.c.l.b16 %v259
    %v484 = vpack.c.b16 %v469, %v468
    %v485 = vpack.c.b16 %v471, %v470
    %v486 = vpack.c.b16 %v473, %v472
    %v487 = vpack.c.b16 %v475, %v474
    %v488 = vpack.c.b16 %v477, %v476
    %v489 = vpack.c.b16 %v479, %v478
    %v490 = vpack.c.b16 %v481, %v480
    %v491 = vpack.c.b16 %v483, %v482
    %500 = vmatprep.subr.bf16.mxu0 0
    %501 = vmatpush1.bf16.msra.mxu0 %v484
    %502 = vmatprep.subr.bf16.mxu0 0
    %503 = vmatpush1.bf16.msra.mxu0 %v485
    %504 = vmatprep.subr.bf16.mxu0 0
    %505 = vmatpush1.bf16.msra.mxu0 %v486
    %506 = vmatprep.subr.bf16.mxu0 0
    %507 = vmatpush1.bf16.msra.mxu0 %v487
    %508 = vmatprep.subr.bf16.mxu0 0
    %509 = vmatpush1.bf16.msra.mxu0 %v488
    %510 = vmatprep.subr.bf16.mxu0 0
    %511 = vmatpush1.bf16.msra.mxu0 %v489
    %512 = vmatprep.subr.bf16.mxu0 0
    %513 = vmatpush1.bf16.msra.mxu0 %v490
    %514 = vmatprep.subr.bf16.mxu0 0
    %515 = vmatpush1.bf16.msra.mxu0 %v491
    %516 = vmatprep.subr.bf16.mxu0 0
    %517 = vmatpush1.bf16.msra.mxu0 0
    %518 = vmatprep.subr.bf16.mxu0 0
    %519 = vmatpush1.bf16.msra.mxu0 0
    %520 = vmatprep.subr.bf16.mxu0 0
    %521 = vmatpush1.bf16.msra.mxu0 0
    %522 = vmatprep.subr.bf16.mxu0 0
    %523 = vmatpush1.bf16.msra.mxu0 0
    %524 = vmatprep.subr.bf16.mxu0 0
    %525 = vmatpush1.bf16.msra.mxu0 0
    %526 = vmatprep.subr.bf16.mxu0 0
    %527 = vmatpush1.bf16.msra.mxu0 0
    %528 = vmatprep.subr.bf16.mxu0 0
    %529 = vmatpush1.bf16.msra.mxu0 0
    %530 = vmatprep.subr.bf16.mxu0 0
    %531 = vmatpush1.bf16.msra.mxu0 0
    %532 = vmatprep.mubr.bf16.mxu0 0
    %533 = vmatmul.mubr.bf16.gmra.mrb[0].mxu0 %v388
    %v534 = vpop.f32.mrb[0].mxu0
    %v535 = vadd.f32 0.0, %v534
    %v536 = vpop.f32.mrb[0].mxu0
    %v537 = vpop.f32.mrb[0].mxu0
    %v538 = vadd.f32 0.0, %v537
    %v539 = vpop.f32.mrb[0].mxu0
    %540 = vmatprep.mubr.bf16.mxu0 0
    %541 = vmatmul.mubr.bf16.gmra.mrb[0].mxu0 %v389
    %v542 = vpop.f32.mrb[0].mxu0
    %v543 = vadd.f32 0.0, %v542
    %v544 = vpop.f32.mrb[0].mxu0
    %v545 = vpop.f32.mrb[0].mxu0
    %v546 = vadd.f32 0.0, %v545
    %v547 = vpop.f32.mrb[0].mxu0
    %548 = vmatprep.mubr.bf16.mxu0 0
    %549 = vmatmul.mubr.bf16.gmra.mrb[0].mxu0 %v390
    %v550 = vpop.f32.mrb[0].mxu0
    %v551 = vadd.f32 0.0, %v550
    %v552 = vpop.f32.mrb[0].mxu0
    %v553 = vpop.f32.mrb[0].mxu0
    %v554 = vadd.f32 0.0, %v553
    %v555 = vpop.f32.mrb[0].mxu0
    %556 = vmatprep.mubr.bf16.mxu0 0
    %557 = vmatmul.mubr.bf16.gmra.mrb[0].mxu0 %v391
    %v558 = vpop.f32.mrb[0].mxu0
    %v559 = vadd.f32 0.0, %v558
    %v560 = vpop.f32.mrb[0].mxu0
    %v561 = vpop.f32.mrb[0].mxu0
    %v562 = vadd.f32 0.0, %v561
    %v563 = vpop.f32.mrb[0].mxu0
    %564 = vmatprep.mubr.bf16.mxu0 0
    %565 = vmatmul.mubr.bf16.gmra.mrb[0].mxu0 %v392
    %v566 = vpop.f32.mrb[0].mxu0
    %v567 = vadd.f32 0.0, %v566
    %v568 = vpop.f32.mrb[0].mxu0
    %v569 = vpop.f32.mrb[0].mxu0
    %v570 = vadd.f32 0.0, %v569
    %v571 = vpop.f32.mrb[0].mxu0
    %572 = vmatprep.mubr.bf16.mxu0 0
    %573 = vmatmul.mubr.bf16.gmra.mrb[0].mxu0 %v393
    %v574 = vpop.f32.mrb[0].mxu0
    %v575 = vadd.f32 0.0, %v574
    %v576 = vpop.f32.mrb[0].mxu0
    %v577 = vpop.f32.mrb[0].mxu0
    %v578 = vadd.f32 0.0, %v577
    %v579 = vpop.f32.mrb[0].mxu0
    %580 = vmatprep.mubr.bf16.mxu0 0
    %581 = vmatmul.mubr.bf16.gmra.mrb[0].mxu0 %v394
    %v582 = vpop.f32.mrb[0].mxu0
    %v583 = vadd.f32 0.0, %v582
    %v584 = vpop.f32.mrb[0].mxu0
    %v585 = vpop.f32.mrb[0].mxu0
    %v586 = vadd.f32 0.0, %v585
    %v587 = vpop.f32.mrb[0].mxu0
    %588 = vmatprep.mubr.bf16.mxu0 0
    %589 = vmatmul.mubr.bf16.gmra.mrb[0].mxu0 %v395
    %v590 = vpop.f32.mrb[0].mxu0
    %v591 = vadd.f32 0.0, %v590
    %v592 = vpop.f32.mrb[0].mxu0
    %v593 = vpop.f32.mrb[0].mxu0
    %v594 = vadd.f32 0.0, %v593
    %v595 = vpop.f32.mrb[0].mxu0
    %596 = vmatprep.mubr.bf16.mxu0 0
    %597 = vmatmul.mubr.bf16.gmra.mrb[0].mxu0 %v396
    %v598 = vpop.f32.mrb[0].mxu0
    %v599 = vadd.f32 0.0, %v598
    %v600 = vpop.f32.mrb[0].mxu0
    %v601 = vpop.f32.mrb[0].mxu0
    %v602 = vadd.f32 0.0, %v601
    %v603 = vpop.f32.mrb[0].mxu0
    %604 = vmatprep.mubr.bf16.mxu0 0
    %605 = vmatmul.mubr.bf16.gmra.mrb[0].mxu0 %v397
    %v606 = vpop.f32.mrb[0].mxu0
    %v607 = vadd.f32 0.0, %v606
    %v608 = vpop.f32.mrb[0].mxu0
    %v609 = vpop.f32.mrb[0].mxu0
    %v610 = vadd.f32 0.0, %v609
    %v611 = vpop.f32.mrb[0].mxu0
    %612 = vmatprep.mubr.bf16.mxu0 0
    %613 = vmatmul.mubr.bf16.gmra.mrb[0].mxu0 %v398
    %v614 = vpop.f32.mrb[0].mxu0
    %v615 = vadd.f32 0.0, %v614
    %v616 = vpop.f32.mrb[0].mxu0
    %v617 = vpop.f32.mrb[0].mxu0
    %v618 = vadd.f32 0.0, %v617
    %v619 = vpop.f32.mrb[0].mxu0
    %620 = vmatprep.mubr.bf16.mxu0 0
    %621 = vmatmul.mubr.bf16.gmra.mrb[0].mxu0 %v399
    %v622 = vpop.f32.mrb[0].mxu0
    %v623 = vadd.f32 0.0, %v622
    %v624 = vpop.f32.mrb[0].mxu0
    %v625 = vpop.f32.mrb[0].mxu0
    %v626 = vadd.f32 0.0, %v625
    %v627 = vpop.f32.mrb[0].mxu0
    %628 = vmatprep.mubr.bf16.mxu0 0
    %629 = vmatmul.mubr.bf16.gmra.mrb[0].mxu0 %v400
    %v630 = vpop.f32.mrb[0].mxu0
    %v631 = vadd.f32 0.0, %v630
    %v632 = vpop.f32.mrb[0].mxu0
    %v633 = vpop.f32.mrb[0].mxu0
    %v634 = vadd.f32 0.0, %v633
    %v635 = vpop.f32.mrb[0].mxu0
    %636 = vmatprep.mubr.bf16.mxu0 0
    %637 = vmatmul.mubr.bf16.gmra.mrb[0].mxu0 %v401
    %v638 = vpop.f32.mrb[0].mxu0
    %v639 = vadd.f32 0.0, %v638
    %v640 = vpop.f32.mrb[0].mxu0
    %v641 = vpop.f32.mrb[0].mxu0
    %v642 = vadd.f32 0.0, %v641
    %v643 = vpop.f32.mrb[0].mxu0
    %644 = vmatprep.mubr.bf16.mxu0 0
    %645 = vmatmul.mubr.bf16.gmra.mrb[0].mxu0 %v402
    %v646 = vpop.f32.mrb[0].mxu0
    %v647 = vadd.f32 0.0, %v646
    %v648 = vpop.f32.mrb[0].mxu0
    %v649 = vpop.f32.mrb[0].mxu0
    %v650 = vadd.f32 0.0, %v649
    %v651 = vpop.f32.mrb[0].mxu0
    %652 = vmatprep.mubr.bf16.mxu0 0
    %653 = vmatmul.mubr.bf16.gmra.mrb[0].mxu0 %v403
    %v654 = vpop.f32.mrb[0].mxu0
    %v655 = vadd.f32 0.0, %v654
    %v656 = vpop.f32.mrb[0].mxu0
    %v657 = vpop.f32.mrb[0].mxu0
    %v658 = vadd.f32 0.0, %v657
    %v659 = vpop.f32.mrb[0].mxu0
    %660 = vmatprep.mubr.bf16.mxu0 0
    %661 = vmatmul.mubr.bf16.gmra.mrb[0].mxu0 %v404
    %v662 = vpop.f32.mrb[0].mxu0
    %v663 = vadd.f32 0.0, %v662
    %v664 = vpop.f32.mrb[0].mxu0
    %v665 = vpop.f32.mrb[0].mxu0
    %v666 = vadd.f32 0.0, %v665
    %v667 = vpop.f32.mrb[0].mxu0
    %668 = vmatprep.mubr.bf16.mxu0 0
    %669 = vmatmul.mubr.bf16.gmra.mrb[0].mxu0 %v405
    %v670 = vpop.f32.mrb[0].mxu0
    %v671 = vadd.f32 0.0, %v670
    %v672 = vpop.f32.mrb[0].mxu0
    %v673 = vpop.f32.mrb[0].mxu0
    %v674 = vadd.f32 0.0, %v673
    %v675 = vpop.f32.mrb[0].mxu0
    %676 = vmatprep.mubr.bf16.mxu0 0
    %677 = vmatmul.mubr.bf16.gmra.mrb[0].mxu0 %v406
    %v678 = vpop.f32.mrb[0].mxu0
    %v679 = vadd.f32 0.0, %v678
    %v680 = vpop.f32.mrb[0].mxu0
    %v681 = vpop.f32.mrb[0].mxu0
    %v682 = vadd.f32 0.0, %v681
    %v683 = vpop.f32.mrb[0].mxu0
    %684 = vmatprep.mubr.bf16.mxu0 0
    %685 = vmatmul.mubr.bf16.gmra.mrb[0].mxu0 %v407
    %v686 = vpop.f32.mrb[0].mxu0
    %v687 = vadd.f32 0.0, %v686
    %v688 = vpop.f32.mrb[0].mxu0
    %v689 = vpop.f32.mrb[0].mxu0
    %v690 = vadd.f32 0.0, %v689
    %v691 = vpop.f32.mrb[0].mxu0
    %692 = vmatprep.mubr.bf16.mxu0 0
    %693 = vmatmul.mubr.bf16.gmra.mrb[0].mxu0 %v408
    %v694 = vpop.f32.mrb[0].mxu0
    %v695 = vadd.f32 0.0, %v694
    %v696 = vpop.f32.mrb[0].mxu0
    %v697 = vpop.f32.mrb[0].mxu0
    %v698 = vadd.f32 0.0, %v697
    %v699 = vpop.f32.mrb[0].mxu0
    %700 = vmatprep.mubr.bf16.mxu0 0
    %701 = vmatmul.mubr.bf16.gmra.mrb[0].mxu0 %v409
    %v702 = vpop.f32.mrb[0].mxu0
    %v703 = vadd.f32 0.0, %v702
    %v704 = vpop.f32.mrb[0].mxu0
    %v705 = vpop.f32.mrb[0].mxu0
    %v706 = vadd.f32 0.0, %v705
    %v707 = vpop.f32.mrb[0].mxu0
    %708 = vmatprep.mubr.bf16.mxu0 0
    %709 = vmatmul.mubr.bf16.gmra.mrb[0].mxu0 %v410
    %v710 = vpop.f32.mrb[0].mxu0
    %v711 = vadd.f32 0.0, %v710
    %v712 = vpop.f32.mrb[0].mxu0
    %v713 = vpop.f32.mrb[0].mxu0
    %v714 = vadd.f32 0.0, %v713
    %v715 = vpop.f32.mrb[0].mxu0
    %716 = vmatprep.mubr.bf16.mxu0 0
    %717 = vmatmul.mubr.bf16.gmra.mrb[0].mxu0 %v411
    %v718 = vpop.f32.mrb[0].mxu0
    %v719 = vadd.f32 0.0, %v718
    %v720 = vpop.f32.mrb[0].mxu0
    %v721 = vpop.f32.mrb[0].mxu0
    %v722 = vadd.f32 0.0, %v721
    %v723 = vpop.f32.mrb[0].mxu0
    %724 = vmatprep.mubr.bf16.mxu0 0
    %725 = vmatmul.mubr.bf16.gmra.mrb[0].mxu0 %v412
    %v726 = vpop.f32.mrb[0].mxu0
    %v727 = vadd.f32 0.0, %v726
    %v728 = vpop.f32.mrb[0].mxu0
    %v729 = vpop.f32.mrb[0].mxu0
    %v730 = vadd.f32 0.0, %v729
    %v731 = vpop.f32.mrb[0].mxu0
    %732 = vmatprep.mubr.bf16.mxu0 0
    %733 = vmatmul.mubr.bf16.gmra.mrb[0].mxu0 %v413
    %v734 = vpop.f32.mrb[0].mxu0
    %v735 = vadd.f32 0.0, %v734
    %v736 = vpop.f32.mrb[0].mxu0
    %v737 = vpop.f32.mrb[0].mxu0
    %v738 = vadd.f32 0.0, %v737
    %v739 = vpop.f32.mrb[0].mxu0
    %740 = vmatprep.mubr.bf16.mxu0 0
    %741 = vmatmul.mubr.bf16.gmra.mrb[0].mxu0 %v414
    %v742 = vpop.f32.mrb[0].mxu0
    %v743 = vadd.f32 0.0, %v742
    %v744 = vpop.f32.mrb[0].mxu0
    %v745 = vpop.f32.mrb[0].mxu0
    %v746 = vadd.f32 0.0, %v745
    %v747 = vpop.f32.mrb[0].mxu0
    %748 = vmatprep.mubr.bf16.mxu0 0
    %749 = vmatmul.mubr.bf16.gmra.mrb[0].mxu0 %v415
    %v750 = vpop.f32.mrb[0].mxu0
    %v751 = vadd.f32 0.0, %v750
    %v752 = vpop.f32.mrb[0].mxu0
    %v753 = vpop.f32.mrb[0].mxu0
    %v754 = vadd.f32 0.0, %v753
    %v755 = vpop.f32.mrb[0].mxu0
    %756 = vmatprep.mubr.bf16.mxu0 0
    %757 = vmatmul.mubr.bf16.gmra.mrb[0].mxu0 %v416
    %v758 = vpop.f32.mrb[0].mxu0
    %v759 = vadd.f32 0.0, %v758
    %v760 = vpop.f32.mrb[0].mxu0
    %v761 = vpop.f32.mrb[0].mxu0
    %v762 = vadd.f32 0.0, %v761
    %v763 = vpop.f32.mrb[0].mxu0
    %764 = vmatprep.mubr.bf16.mxu0 0
    %765 = vmatmul.mubr.bf16.gmra.mrb[0].mxu0 %v417
    %v766 = vpop.f32.mrb[0].mxu0
    %v767 = vadd.f32 0.0, %v766
    %v768 = vpop.f32.mrb[0].mxu0
    %v769 = vpop.f32.mrb[0].mxu0
    %v770 = vadd.f32 0.0, %v769
    %v771 = vpop.f32.mrb[0].mxu0
    %772 = vmatprep.mubr.bf16.mxu0 0
    %773 = vmatmul.mubr.bf16.gmra.mrb[0].mxu0 %v418
    %v774 = vpop.f32.mrb[0].mxu0
    %v775 = vadd.f32 0.0, %v774
    %v776 = vpop.f32.mrb[0].mxu0
    %v777 = vpop.f32.mrb[0].mxu0
    %v778 = vadd.f32 0.0, %v777
    %v779 = vpop.f32.mrb[0].mxu0
    %780 = vmatprep.mubr.bf16.mxu0 0
    %781 = vmatmul.mubr.bf16.gmra.mrb[0].mxu0 %v419
    %v782 = vpop.f32.mrb[0].mxu0
    %v783 = vadd.f32 0.0, %v782
    %v784 = vpop.f32.mrb[0].mxu0
    %v785 = vpop.f32.mrb[0].mxu0
    %v786 = vadd.f32 0.0, %v785
    %v787 = vpop.f32.mrb[0].mxu0
    %788 = vdwg.mxu0
    %v789 = vadd.f32 %v116, %v535
    %v790 = vadd.f32 %v117, %v538
    %v791 = vadd.f32 %v118, %v543
    %v792 = vadd.f32 %v119, %v546
    %v793 = vadd.f32 %v120, %v551
    %v794 = vadd.f32 %v121, %v554
    %v795 = vadd.f32 %v122, %v559
    %v796 = vadd.f32 %v123, %v562
    %v797 = vadd.f32 %v124, %v567
    %v798 = vadd.f32 %v125, %v570
    %v799 = vadd.f32 %v126, %v575
    %v800 = vadd.f32 %v127, %v578
    %v801 = vadd.f32 %v128, %v583
    %v802 = vadd.f32 %v129, %v586
    %v803 = vadd.f32 %v130, %v591
    %v804 = vadd.f32 %v131, %v594
    %v805 = vadd.f32 %v132, %v599
    %v806 = vadd.f32 %v133, %v602
    %v807 = vadd.f32 %v134, %v607
    %v808 = vadd.f32 %v135, %v610
    %v809 = vadd.f32 %v136, %v615
    %v810 = vadd.f32 %v137, %v618
    %v811 = vadd.f32 %v138, %v623
    %v812 = vadd.f32 %v139, %v626
    %v813 = vadd.f32 %v140, %v631
    %v814 = vadd.f32 %v141, %v634
    %v815 = vadd.f32 %v142, %v639
    %v816 = vadd.f32 %v143, %v642
    %v817 = vadd.f32 %v144, %v647
    %v818 = vadd.f32 %v145, %v650
    %v819 = vadd.f32 %v146, %v655
    %v820 = vadd.f32 %v147, %v658
    %v821 = vadd.f32 %v148, %v663
    %v822 = vadd.f32 %v149, %v666
    %v823 = vadd.f32 %v150, %v671
    %v824 = vadd.f32 %v151, %v674
    %v825 = vadd.f32 %v152, %v679
    %v826 = vadd.f32 %v153, %v682
    %v827 = vadd.f32 %v154, %v687
    %v828 = vadd.f32 %v155, %v690
    %v829 = vadd.f32 %v156, %v695
    %v830 = vadd.f32 %v157, %v698
    %v831 = vadd.f32 %v158, %v703
    %v832 = vadd.f32 %v159, %v706
    %v833 = vadd.f32 %v160, %v711
    %v834 = vadd.f32 %v161, %v714
    %v835 = vadd.f32 %v162, %v719
    %v836 = vadd.f32 %v163, %v722
    %v837 = vadd.f32 %v164, %v727
    %v838 = vadd.f32 %v165, %v730
    %v839 = vadd.f32 %v166, %v735
    %v840 = vadd.f32 %v167, %v738
    %v841 = vadd.f32 %v168, %v743
    %v842 = vadd.f32 %v169, %v746
    %v843 = vadd.f32 %v170, %v751
    %v844 = vadd.f32 %v171, %v754
    %v845 = vadd.f32 %v172, %v759
    %v846 = vadd.f32 %v173, %v762
    %v847 = vadd.f32 %v174, %v767
    %v848 = vadd.f32 %v175, %v770
    %v849 = vadd.f32 %v176, %v775
    %v850 = vadd.f32 %v177, %v778
    %v851 = vadd.f32 %v178, %v783
    %v852 = vadd.f32 %v179, %v786
    %853 = vst [vmem:[#allocation7] sm:$0xff] %v789
    %854 = vst [vmem:[#allocation7 + $0x8] sm:$0xff] %v790
    %855 = vst [vmem:[#allocation7 + $0x10] sm:$0xff] %v791
    %856 = vst [vmem:[#allocation7 + $0x18] sm:$0xff] %v792
    %857 = vst [vmem:[#allocation7 + $0x20] sm:$0xff] %v793
    %858 = vst [vmem:[#allocation7 + $0x28] sm:$0xff] %v794
    %859 = vst [vmem:[#allocation7 + $0x30] sm:$0xff] %v795
    %860 = vst [vmem:[#allocation7 + $0x38] sm:$0xff] %v796
    %861 = vst [vmem:[#allocation7 + $0x40] sm:$0xff] %v797
    %862 = vst [vmem:[#allocation7 + $0x48] sm:$0xff] %v798
    %863 = vst [vmem:[#allocation7 + $0x50] sm:$0xff] %v799
    %864 = vst [vmem:[#allocation7 + $0x58] sm:$0xff] %v800
    %865 = vst [vmem:[#allocation7 + $0x60] sm:$0xff] %v801
    %866 = vst [vmem:[#allocation7 + $0x68] sm:$0xff] %v802
    %867 = vst [vmem:[#allocation7 + $0x70] sm:$0xff] %v803
    %868 = vst [vmem:[#allocation7 + $0x78] sm:$0xff] %v804
    %869 = vst [vmem:[#allocation7 + $0x80] sm:$0xff] %v805
    %870 = vst [vmem:[#allocation7 + $0x88] sm:$0xff] %v806
    %871 = vst [vmem:[#allocation7 + $0x90] sm:$0xff] %v807
    %872 = vst [vmem:[#allocation7 + $0x98] sm:$0xff] %v808
    %873 = vst [vmem:[#allocation7 + $0xa0] sm:$0xff] %v809
    %874 = vst [vmem:[#allocation7 + $0xa8] sm:$0xff] %v810
    %875 = vst [vmem:[#allocation7 + $0xb0] sm:$0xff] %v811
    %876 = vst [vmem:[#allocation7 + $0xb8] sm:$0xff] %v812
    %877 = vst [vmem:[#allocation7 + $0xc0] sm:$0xff] %v813
    %878 = vst [vmem:[#allocation7 + $0xc8] sm:$0xff] %v814
    %879 = vst [vmem:[#allocation7 + $0xd0] sm:$0xff] %v815
    %880 = vst [vmem:[#allocation7 + $0xd8] sm:$0xff] %v816
    %881 = vst [vmem:[#allocation7 + $0xe0] sm:$0xff] %v817
    %882 = vst [vmem:[#allocation7 + $0xe8] sm:$0xff] %v818
    %883 = vst [vmem:[#allocation7 + $0xf0] sm:$0xff] %v819
    %884 = vst [vmem:[#allocation7 + $0xf8] sm:$0xff] %v820
    %885 = vst [vmem:[#allocation7 + $0x100] sm:$0xff] %v821
    %886 = vst [vmem:[#allocation7 + $0x108] sm:$0xff] %v822
    %887 = vst [vmem:[#allocation7 + $0x110] sm:$0xff] %v823
    %888 = vst [vmem:[#allocation7 + $0x118] sm:$0xff] %v824
    %889 = vst [vmem:[#allocation7 + $0x120] sm:$0xff] %v825
    %890 = vst [vmem:[#allocation7 + $0x128] sm:$0xff] %v826
    %891 = vst [vmem:[#allocation7 + $0x130] sm:$0xff] %v827
    %892 = vst [vmem:[#allocation7 + $0x138] sm:$0xff] %v828
    %893 = vst [vmem:[#allocation7 + $0x140] sm:$0xff] %v829
    %894 = vst [vmem:[#allocation7 + $0x148] sm:$0xff] %v830
    %895 = vst [vmem:[#allocation7 + $0x150] sm:$0xff] %v831
    %896 = vst [vmem:[#allocation7 + $0x158] sm:$0xff] %v832
    %897 = vst [vmem:[#allocation7 + $0x160] sm:$0xff] %v833
    %898 = vst [vmem:[#allocation7 + $0x168] sm:$0xff] %v834
    %899 = vst [vmem:[#allocation7 + $0x170] sm:$0xff] %v835
    %900 = vst [vmem:[#allocation7 + $0x178] sm:$0xff] %v836
    %901 = vst [vmem:[#allocation7 + $0x180] sm:$0xff] %v837
    %902 = vst [vmem:[#allocation7 + $0x188] sm:$0xff] %v838
    %903 = vst [vmem:[#allocation7 + $0x190] sm:$0xff] %v839
    %904 = vst [vmem:[#allocation7 + $0x198] sm:$0xff] %v840
    %905 = vst [vmem:[#allocation7 + $0x1a0] sm:$0xff] %v841
    %906 = vst [vmem:[#allocation7 + $0x1a8] sm:$0xff] %v842
    %907 = vst [vmem:[#allocation7 + $0x1b0] sm:$0xff] %v843
    %908 = vst [vmem:[#allocation7 + $0x1b8] sm:$0xff] %v844
    %909 = vst [vmem:[#allocation7 + $0x1c0] sm:$0xff] %v845
    %910 = vst [vmem:[#allocation7 + $0x1c8] sm:$0xff] %v846
    %911 = vst [vmem:[#allocation7 + $0x1d0] sm:$0xff] %v847
    %912 = vst [vmem:[#allocation7 + $0x1d8] sm:$0xff] %v848
    %913 = vst [vmem:[#allocation7 + $0x1e0] sm:$0xff] %v849
    %914 = vst [vmem:[#allocation7 + $0x1e8] sm:$0xff] %v850
    %915 = vst [vmem:[#allocation7 + $0x1f0] sm:$0xff] %v851
    %916 = vst [vmem:[#allocation7 + $0x1f8] sm:$0xff] %v852
    // Predicated region
    $region26: #{tpu_custom_call.1} parent=1 // pred_check
      %p917 = pneg %p48
    $region27: #{tpu_custom_call.1} parent=1 // pred_check_branch
      %919 = sbr.rel (%p917) target = $region29
    $region28: #{tpu_custom_call.1} parent=1 // pred_region
      %v920 = vld [vmem:[#allocation7] sm:$0xff]
      %v921 = vld [vmem:[#allocation7 + $0x8] sm:$0xff]
      %v922 = vld [vmem:[#allocation7 + $0x10] sm:$0xff]
      %v923 = vld [vmem:[#allocation7 + $0x18] sm:$0xff]
      %v924 = vld [vmem:[#allocation7 + $0x20] sm:$0xff]
      %v925 = vld [vmem:[#allocation7 + $0x28] sm:$0xff]
      %v926 = vld [vmem:[#allocation7 + $0x30] sm:$0xff]
      %v927 = vld [vmem:[#allocation7 + $0x38] sm:$0xff]
      %v928 = vld [vmem:[#allocation7 + $0x40] sm:$0xff]
      %v929 = vld [vmem:[#allocation7 + $0x48] sm:$0xff]
      %v930 = vld [vmem:[#allocation7 + $0x50] sm:$0xff]
      %v931 = vld [vmem:[#allocation7 + $0x58] sm:$0xff]
      %v932 = vld [vmem:[#allocation7 + $0x60] sm:$0xff]
      %v933 = vld [vmem:[#allocation7 + $0x68] sm:$0xff]
      %v934 = vld [vmem:[#allocation7 + $0x70] sm:$0xff]
      %v935 = vld [vmem:[#allocation7 + $0x78] sm:$0xff]
      %v936 = vld [vmem:[#allocation7 + $0x80] sm:$0xff]
      %v937 = vld [vmem:[#allocation7 + $0x88] sm:$0xff]
      %v938 = vld [vmem:[#allocation7 + $0x90] sm:$0xff]
      %v939 = vld [vmem:[#allocation7 + $0x98] sm:$0xff]
      %v940 = vld [vmem:[#allocation7 + $0xa0] sm:$0xff]
      %v941 = vld [vmem:[#allocation7 + $0xa8] sm:$0xff]
      %v942 = vld [vmem:[#allocation7 + $0xb0] sm:$0xff]
      %v943 = vld [vmem:[#allocation7 + $0xb8] sm:$0xff]
      %v944 = vld [vmem:[#allocation7 + $0xc0] sm:$0xff]
      %v945 = vld [vmem:[#allocation7 + $0xc8] sm:$0xff]
      %v946 = vld [vmem:[#allocation7 + $0xd0] sm:$0xff]
      %v947 = vld [vmem:[#allocation7 + $0xd8] sm:$0xff]
      %v948 = vld [vmem:[#allocation7 + $0xe0] sm:$0xff]
      %v949 = vld [vmem:[#allocation7 + $0xe8] sm:$0xff]
      %v950 = vld [vmem:[#allocation7 + $0xf0] sm:$0xff]
      %v951 = vld [vmem:[#allocation7 + $0xf8] sm:$0xff]
      %v952 = vld [vmem:[#allocation7 + $0x100] sm:$0xff]
      %v953 = vld [vmem:[#allocation7 + $0x108] sm:$0xff]
      %v954 = vld [vmem:[#allocation7 + $0x110] sm:$0xff]
      %v955 = vld [vmem:[#allocation7 + $0x118] sm:$0xff]
      %v956 = vld [vmem:[#allocation7 + $0x120] sm:$0xff]
      %v957 = vld [vmem:[#allocation7 + $0x128] sm:$0xff]
      %v958 = vld [vmem:[#allocation7 + $0x130] sm:$0xff]
      %v959 = vld [vmem:[#allocation7 + $0x138] sm:$0xff]
      %v960 = vld [vmem:[#allocation7 + $0x140] sm:$0xff]
      %v961 = vld [vmem:[#allocation7 + $0x148] sm:$0xff]
      %v962 = vld [vmem:[#allocation7 + $0x150] sm:$0xff]
      %v963 = vld [vmem:[#allocation7 + $0x158] sm:$0xff]
      %v964 = vld [vmem:[#allocation7 + $0x160] sm:$0xff]
      %v965 = vld [vmem:[#allocation7 + $0x168] sm:$0xff]
      %v966 = vld [vmem:[#allocation7 + $0x170] sm:$0xff]
      %v967 = vld [vmem:[#allocation7 + $0x178] sm:$0xff]
      %v968 = vld [vmem:[#allocation7 + $0x180] sm:$0xff]
      %v969 = vld [vmem:[#allocation7 + $0x188] sm:$0xff]
      %v970 = vld [vmem:[#allocation7 + $0x190] sm:$0xff]
      %v971 = vld [vmem:[#allocation7 + $0x198] sm:$0xff]
      %v972 = vld [vmem:[#allocation7 + $0x1a0] sm:$0xff]
      %v973 = vld [vmem:[#allocation7 + $0x1a8] sm:$0xff]
      %v974 = vld [vmem:[#allocation7 + $0x1b0] sm:$0xff]
      %v975 = vld [vmem:[#allocation7 + $0x1b8] sm:$0xff]
      %v976 = vld [vmem:[#allocation7 + $0x1c0] sm:$0xff]
      %v977 = vld [vmem:[#allocation7 + $0x1c8] sm:$0xff]
      %v978 = vld [vmem:[#allocation7 + $0x1d0] sm:$0xff]
      %v979 = vld [vmem:[#allocation7 + $0x1d8] sm:$0xff]
      %v980 = vld [vmem:[#allocation7 + $0x1e0] sm:$0xff]
      %v981 = vld [vmem:[#allocation7 + $0x1e8] sm:$0xff]
      %v982 = vld [vmem:[#allocation7 + $0x1f0] sm:$0xff]
      %v983 = vld [vmem:[#allocation7 + $0x1f8] sm:$0xff]
      %v984 = vld [vmem:[%s2] sm:$0x1]
      %v986 = vlaneseq
      %v987 = vshrl.u32 %v986, 7
      %v988 = vsub.s32 0, %v987
      %v989 = vrot.slane %v984, %v988
      %v991 = vadd.f32 %v920, %v989
      %v992 = vadd.f32 %v921, %v989
      %v993 = vadd.f32 %v922, %v989
      %v994 = vadd.f32 %v923, %v989
      %v995 = vadd.f32 %v924, %v989
      %v996 = vadd.f32 %v925, %v989
      %v997 = vadd.f32 %v926, %v989
      %v998 = vadd.f32 %v927, %v989
      %v999 = vadd.f32 %v928, %v989
      %v1000 = vadd.f32 %v929, %v989
      %v1001 = vadd.f32 %v930, %v989
      %v1002 = vadd.f32 %v931, %v989
      %v1003 = vadd.f32 %v932, %v989
      %v1004 = vadd.f32 %v933, %v989
      %v1005 = vadd.f32 %v934, %v989
      %v1006 = vadd.f32 %v935, %v989
      %v1007 = vadd.f32 %v936, %v989
      %v1008 = vadd.f32 %v937, %v989
      %v1009 = vadd.f32 %v938, %v989
      %v1010 = vadd.f32 %v939, %v989
      %v1011 = vadd.f32 %v940, %v989
      %v1012 = vadd.f32 %v941, %v989
      %v1013 = vadd.f32 %v942, %v989
      %v1014 = vadd.f32 %v943, %v989
      %v1015 = vadd.f32 %v944, %v989
      %v1016 = vadd.f32 %v945, %v989
      %v1017 = vadd.f32 %v946, %v989
      %v1018 = vadd.f32 %v947, %v989
      %v1019 = vadd.f32 %v948, %v989
      %v1020 = vadd.f32 %v949, %v989
      %v1021 = vadd.f32 %v950, %v989
      %v1022 = vadd.f32 %v951, %v989
      %v1023 = vadd.f32 %v952, %v989
      %v1024 = vadd.f32 %v953, %v989
      %v1025 = vadd.f32 %v954, %v989
      %v1026 = vadd.f32 %v955, %v989
      %v1027 = vadd.f32 %v956, %v989
      %v1028 = vadd.f32 %v957, %v989
      %v1029 = vadd.f32 %v958, %v989
      %v1030 = vadd.f32 %v959, %v989
      %v1031 = vadd.f32 %v960, %v989
      %v1032 = vadd.f32 %v961, %v989
      %v1033 = vadd.f32 %v962, %v989
      %v1034 = vadd.f32 %v963, %v989
      %v1035 = vadd.f32 %v964, %v989
      %v1036 = vadd.f32 %v965, %v989
      %v1037 = vadd.f32 %v966, %v989
      %v1038 = vadd.f32 %v967, %v989
      %v1039 = vadd.f32 %v968, %v989
      %v1040 = vadd.f32 %v969, %v989
      %v1041 = vadd.f32 %v970, %v989
      %v1042 = vadd.f32 %v971, %v989
      %v1043 = vadd.f32 %v972, %v989
      %v1044 = vadd.f32 %v973, %v989
      %v1045 = vadd.f32 %v974, %v989
      %v1046 = vadd.f32 %v975, %v989
      %v1047 = vadd.f32 %v976, %v989
      %v1048 = vadd.f32 %v977, %v989
      %v1049 = vadd.f32 %v978, %v989
      %v1050 = vadd.f32 %v979, %v989
      %v1051 = vadd.f32 %v980, %v989
      %v1052 = vadd.f32 %v981, %v989
      %v1053 = vadd.f32 %v982, %v989
      %v1054 = vadd.f32 %v983, %v989
      %1055 = vst [vmem:[#allocation7] sm:$0xff] %v991
      %1056 = vst [vmem:[#allocation7 + $0x8] sm:$0xff] %v992
      %1057 = vst [vmem:[#allocation7 + $0x10] sm:$0xff] %v993
      %1058 = vst [vmem:[#allocation7 + $0x18] sm:$0xff] %v994
      %1059 = vst [vmem:[#allocation7 + $0x20] sm:$0xff] %v995
      %1060 = vst [vmem:[#allocation7 + $0x28] sm:$0xff] %v996
      %1061 = vst [vmem:[#allocation7 + $0x30] sm:$0xff] %v997
      %1062 = vst [vmem:[#allocation7 + $0x38] sm:$0xff] %v998
      %1063 = vst [vmem:[#allocation7 + $0x40] sm:$0xff] %v999
      %1064 = vst [vmem:[#allocation7 + $0x48] sm:$0xff] %v1000
      %1065 = vst [vmem:[#allocation7 + $0x50] sm:$0xff] %v1001
      %1066 = vst [vmem:[#allocation7 + $0x58] sm:$0xff] %v1002
      %1067 = vst [vmem:[#allocation7 + $0x60] sm:$0xff] %v1003
      %1068 = vst [vmem:[#allocation7 + $0x68] sm:$0xff] %v1004
      %1069 = vst [vmem:[#allocation7 + $0x70] sm:$0xff] %v1005
      %1070 = vst [vmem:[#allocation7 + $0x78] sm:$0xff] %v1006
      %1071 = vst [vmem:[#allocation7 + $0x80] sm:$0xff] %v1007
      %1072 = vst [vmem:[#allocation7 + $0x88] sm:$0xff] %v1008
      %1073 = vst [vmem:[#allocation7 + $0x90] sm:$0xff] %v1009
      %1074 = vst [vmem:[#allocation7 + $0x98] sm:$0xff] %v1010
      %1075 = vst [vmem:[#allocation7 + $0xa0] sm:$0xff] %v1011
      %1076 = vst [vmem:[#allocation7 + $0xa8] sm:$0xff] %v1012
      %1077 = vst [vmem:[#allocation7 + $0xb0] sm:$0xff] %v1013
      %1078 = vst [vmem:[#allocation7 + $0xb8] sm:$0xff] %v1014
      %1079 = vst [vmem:[#allocation7 + $0xc0] sm:$0xff] %v1015
      %1080 = vst [vmem:[#allocation7 + $0xc8] sm:$0xff] %v1016
      %1081 = vst [vmem:[#allocation7 + $0xd0] sm:$0xff] %v1017
      %1082 = vst [vmem:[#allocation7 + $0xd8] sm:$0xff] %v1018
      %1083 = vst [vmem:[#allocation7 + $0xe0] sm:$0xff] %v1019
      %1084 = vst [vmem:[#allocation7 + $0xe8] sm:$0xff] %v1020
      %1085 = vst [vmem:[#allocation7 + $0xf0] sm:$0xff] %v1021
      %1086 = vst [vmem:[#allocation7 + $0xf8] sm:$0xff] %v1022
      %1087 = vst [vmem:[#allocation7 + $0x100] sm:$0xff] %v1023
      %1088 = vst [vmem:[#allocation7 + $0x108] sm:$0xff] %v1024
      %1089 = vst [vmem:[#allocation7 + $0x110] sm:$0xff] %v1025
      %1090 = vst [vmem:[#allocation7 + $0x118] sm:$0xff] %v1026
      %1091 = vst [vmem:[#allocation7 + $0x120] sm:$0xff] %v1027
      %1092 = vst [vmem:[#allocation7 + $0x128] sm:$0xff] %v1028
      %1093 = vst [vmem:[#allocation7 + $0x130] sm:$0xff] %v1029
      %1094 = vst [vmem:[#allocation7 + $0x138] sm:$0xff] %v1030
      %1095 = vst [vmem:[#allocation7 + $0x140] sm:$0xff] %v1031
      %1096 = vst [vmem:[#allocation7 + $0x148] sm:$0xff] %v1032
      %1097 = vst [vmem:[#allocation7 + $0x150] sm:$0xff] %v1033
      %1098 = vst [vmem:[#allocation7 + $0x158] sm:$0xff] %v1034
      %1099 = vst [vmem:[#allocation7 + $0x160] sm:$0xff] %v1035
      %1100 = vst [vmem:[#allocation7 + $0x168] sm:$0xff] %v1036
      %1101 = vst [vmem:[#allocation7 + $0x170] sm:$0xff] %v1037
      %1102 = vst [vmem:[#allocation7 + $0x178] sm:$0xff] %v1038
      %1103 = vst [vmem:[#allocation7 + $0x180] sm:$0xff] %v1039
      %1104 = vst [vmem:[#allocation7 + $0x188] sm:$0xff] %v1040
      %1105 = vst [vmem:[#allocation7 + $0x190] sm:$0xff] %v1041
      %1106 = vst [vmem:[#allocation7 + $0x198] sm:$0xff] %v1042
      %1107 = vst [vmem:[#allocation7 + $0x1a0] sm:$0xff] %v1043
      %1108 = vst [vmem:[#allocation7 + $0x1a8] sm:$0xff] %v1044
      %1109 = vst [vmem:[#allocation7 + $0x1b0] sm:$0xff] %v1045
      %1110 = vst [vmem:[#allocation7 + $0x1b8] sm:$0xff] %v1046
      %1111 = vst [vmem:[#allocation7 + $0x1c0] sm:$0xff] %v1047
      %1112 = vst [vmem:[#allocation7 + $0x1c8] sm:$0xff] %v1048
      %1113 = vst [vmem:[#allocation7 + $0x1d0] sm:$0xff] %v1049
      %1114 = vst [vmem:[#allocation7 + $0x1d8] sm:$0xff] %v1050
      %1115 = vst [vmem:[#allocation7 + $0x1e0] sm:$0xff] %v1051
      %1116 = vst [vmem:[#allocation7 + $0x1e8] sm:$0xff] %v1052
      %1117 = vst [vmem:[#allocation7 + $0x1f0] sm:$0xff] %v1053
      %1118 = vst [vmem:[#allocation7 + $0x1f8] sm:$0xff] %v1054
      %v1119 = vand.u32 2147483647, %v991
      %v1120 = vand.u32 2147483647, %v992
      %v1121 = vand.u32 2147483647, %v993
      %v1122 = vand.u32 2147483647, %v994
      %v1123 = vand.u32 2147483647, %v995
      %v1124 = vand.u32 2147483647, %v996
      %v1125 = vand.u32 2147483647, %v997
      %v1126 = vand.u32 2147483647, %v998
      %v1127 = vand.u32 2147483647, %v999
      %v1128 = vand.u32 2147483647, %v1000
      %v1129 = vand.u32 2147483647, %v1001
      %v1130 = vand.u32 2147483647, %v1002
      %v1131 = vand.u32 2147483647, %v1003
      %v1132 = vand.u32 2147483647, %v1004
      %v1133 = vand.u32 2147483647, %v1005
      %v1134 = vand.u32 2147483647, %v1006
      %v1135 = vand.u32 2147483647, %v1007
      %v1136 = vand.u32 2147483647, %v1008
      %v1137 = vand.u32 2147483647, %v1009
      %v1138 = vand.u32 2147483647, %v1010
      %v1139 = vand.u32 2147483647, %v1011
      %v1140 = vand.u32 2147483647, %v1012
      %v1141 = vand.u32 2147483647, %v1013
      %v1142 = vand.u32 2147483647, %v1014
      %v1143 = vand.u32 2147483647, %v1015
      %v1144 = vand.u32 2147483647, %v1016
      %v1145 = vand.u32 2147483647, %v1017
      %v1146 = vand.u32 2147483647, %v1018
      %v1147 = vand.u32 2147483647, %v1019
      %v1148 = vand.u32 2147483647, %v1020
      %v1149 = vand.u32 2147483647, %v1021
      %v1150 = vand.u32 2147483647, %v1022
      %v1151 = vand.u32 2147483647, %v1023
      %v1152 = vand.u32 2147483647, %v1024
      %v1153 = vand.u32 2147483647, %v1025
      %v1154 = vand.u32 2147483647, %v1026
      %v1155 = vand.u32 2147483647, %v1027
      %v1156 = vand.u32 2147483647, %v1028
      %v1157 = vand.u32 2147483647, %v1029
      %v1158 = vand.u32 2147483647, %v1030
      %v1159 = vand.u32 2147483647, %v1031
      %v1160 = vand.u32 2147483647, %v1032
      %v1161 = vand.u32 2147483647, %v1033
      %v1162 = vand.u32 2147483647, %v1034
      %v1163 = vand.u32 2147483647, %v1035
      %v1164 = vand.u32 2147483647, %v1036
      %v1165 = vand.u32 2147483647, %v1037
      %v1166 = vand.u32 2147483647, %v1038
      %v1167 = vand.u32 2147483647, %v1039
      %v1168 = vand.u32 2147483647, %v1040
      %v1169 = vand.u32 2147483647, %v1041
      %v1170 = vand.u32 2147483647, %v1042
      %v1171 = vand.u32 2147483647, %v1043
      %v1172 = vand.u32 2147483647, %v1044
      %v1173 = vand.u32 2147483647, %v1045
      %v1174 = vand.u32 2147483647, %v1046
      %v1175 = vand.u32 2147483647, %v1047
      %v1176 = vand.u32 2147483647, %v1048
      %v1177 = vand.u32 2147483647, %v1049
      %v1178 = vand.u32 2147483647, %v1050
      %v1179 = vand.u32 2147483647, %v1051
      %v1180 = vand.u32 2147483647, %v1052
      %v1181 = vand.u32 2147483647, %v1053
      %v1182 = vand.u32 2147483647, %v1054
      %v1183 = vlog2.pop %v1119
      %v1184 = vmul.f32 %v1183, 0.6931472
      %v1185 = vlog2.pop %v1120
      %v1186 = vmul.f32 %v1185, 0.6931472
      %v1187 = vlog2.pop %v1121
      %v1188 = vmul.f32 %v1187, 0.6931472
      %v1189 = vlog2.pop %v1122
      %v1190 = vmul.f32 %v1189, 0.6931472
      %v1191 = vlog2.pop %v1123
      %v1192 = vmul.f32 %v1191, 0.6931472
      %v1193 = vlog2.pop %v1124
      %v1194 = vmul.f32 %v1193, 0.6931472
      %v1195 = vlog2.pop %v1125
      %v1196 = vmul.f32 %v1195, 0.6931472
      %v1197 = vlog2.pop %v1126
      %v1198 = vmul.f32 %v1197, 0.6931472
      %v1199 = vlog2.pop %v1127
      %v1200 = vmul.f32 %v1199, 0.6931472
      %v1201 = vlog2.pop %v1128
      %v1202 = vmul.f32 %v1201, 0.6931472
      %v1203 = vlog2.pop %v1129
      %v1204 = vmul.f32 %v1203, 0.6931472
      %v1205 = vlog2.pop %v1130
      %v1206 = vmul.f32 %v1205, 0.6931472
      %v1207 = vlog2.pop %v1131
      %v1208 = vmul.f32 %v1207, 0.6931472
      %v1209 = vlog2.pop %v1132
      %v1210 = vmul.f32 %v1209, 0.6931472
      %v1211 = vlog2.pop %v1133
      %v1212 = vmul.f32 %v1211, 0.6931472
      %v1213 = vlog2.pop %v1134
      %v1214 = vmul.f32 %v1213, 0.6931472
      %v1215 = vlog2.pop %v1135
      %v1216 = vmul.f32 %v1215, 0.6931472
      %v1217 = vlog2.pop %v1136
      %v1218 = vmul.f32 %v1217, 0.6931472
      %v1219 = vlog2.pop %v1137
      %v1220 = vmul.f32 %v1219, 0.6931472
      %v1221 = vlog2.pop %v1138
      %v1222 = vmul.f32 %v1221, 0.6931472
      %v1223 = vlog2.pop %v1139
      %v1224 = vmul.f32 %v1223, 0.6931472
      %v1225 = vlog2.pop %v1140
      %v1226 = vmul.f32 %v1225, 0.6931472
      %v1227 = vlog2.pop %v1141
      %v1228 = vmul.f32 %v1227, 0.6931472
      %v1229 = vlog2.pop %v1142
      %v1230 = vmul.f32 %v1229, 0.6931472
      %v1231 = vlog2.pop %v1143
      %v1232 = vmul.f32 %v1231, 0.6931472
      %v1233 = vlog2.pop %v1144
      %v1234 = vmul.f32 %v1233, 0.6931472
      %v1235 = vlog2.pop %v1145
      %v1236 = vmul.f32 %v1235, 0.6931472
      %v1237 = vlog2.pop %v1146
      %v1238 = vmul.f32 %v1237, 0.6931472
      %v1239 = vlog2.pop %v1147
      %v1240 = vmul.f32 %v1239, 0.6931472
      %v1241 = vlog2.pop %v1148
      %v1242 = vmul.f32 %v1241, 0.6931472
      %v1243 = vlog2.pop %v1149
      %v1244 = vmul.f32 %v1243, 0.6931472
      %v1245 = vlog2.pop %v1150
      %v1246 = vmul.f32 %v1245, 0.6931472
      %v1247 = vlog2.pop %v1151
      %v1248 = vmul.f32 %v1247, 0.6931472
      %v1249 = vlog2.pop %v1152
      %v1250 = vmul.f32 %v1249, 0.6931472
      %v1251 = vlog2.pop %v1153
      %v1252 = vmul.f32 %v1251, 0.6931472
      %v1253 = vlog2.pop %v1154
      %v1254 = vmul.f32 %v1253, 0.6931472
      %v1255 = vlog2.pop %v1155
      %v1256 = vmul.f32 %v1255, 0.6931472
      %v1257 = vlog2.pop %v1156
      %v1258 = vmul.f32 %v1257, 0.6931472
      %v1259 = vlog2.pop %v1157
      %v1260 = vmul.f32 %v1259, 0.6931472
      %v1261 = vlog2.pop %v1158
      %v1262 = vmul.f32 %v1261, 0.6931472
      %v1263 = vlog2.pop %v1159
      %v1264 = vmul.f32 %v1263, 0.6931472
      %v1265 = vlog2.pop %v1160
      %v1266 = vmul.f32 %v1265, 0.6931472
      %v1267 = vlog2.pop %v1161
      %v1268 = vmul.f32 %v1267, 0.6931472
      %v1269 = vlog2.pop %v1162
      %v1270 = vmul.f32 %v1269, 0.6931472
      %v1271 = vlog2.pop %v1163
      %v1272 = vmul.f32 %v1271, 0.6931472
      %v1273 = vlog2.pop %v1164
      %v1274 = vmul.f32 %v1273, 0.6931472
      %v1275 = vlog2.pop %v1165
      %v1276 = vmul.f32 %v1275, 0.6931472
      %v1277 = vlog2.pop %v1166
      %v1278 = vmul.f32 %v1277, 0.6931472
      %v1279 = vlog2.pop %v1167
      %v1280 = vmul.f32 %v1279, 0.6931472
      %v1281 = vlog2.pop %v1168
      %v1282 = vmul.f32 %v1281, 0.6931472
      %v1283 = vlog2.pop %v1169
      %v1284 = vmul.f32 %v1283, 0.6931472
      %v1285 = vlog2.pop %v1170
      %v1286 = vmul.f32 %v1285, 0.6931472
      %v1287 = vlog2.pop %v1171
      %v1288 = vmul.f32 %v1287, 0.6931472
      %v1289 = vlog2.pop %v1172
      %v1290 = vmul.f32 %v1289, 0.6931472
      %v1291 = vlog2.pop %v1173
      %v1292 = vmul.f32 %v1291, 0.6931472
      %v1293 = vlog2.pop %v1174
      %v1294 = vmul.f32 %v1293, 0.6931472
      %v1295 = vlog2.pop %v1175
      %v1296 = vmul.f32 %v1295, 0.6931472
      %v1297 = vlog2.pop %v1176
      %v1298 = vmul.f32 %v1297, 0.6931472
      %v1299 = vlog2.pop %v1177
      %v1300 = vmul.f32 %v1299, 0.6931472
      %v1301 = vlog2.pop %v1178
      %v1302 = vmul.f32 %v1301, 0.6931472
      %v1303 = vlog2.pop %v1179
      %v1304 = vmul.f32 %v1303, 0.6931472
      %v1305 = vlog2.pop %v1180
      %v1306 = vmul.f32 %v1305, 0.6931472
      %v1307 = vlog2.pop %v1181
      %v1308 = vmul.f32 %v1307, 0.6931472
      %v1309 = vlog2.pop %v1182
      %v1310 = vmul.f32 %v1309, 0.6931472
      %v1311 = vmul.f32 %v1184, 1.442695
      %v1312 = vmul.f32 %v1186, 1.442695
      %v1313 = vmul.f32 %v1188, 1.442695
      %v1314 = vmul.f32 %v1190, 1.442695
      %v1315 = vmul.f32 %v1192, 1.442695
      %v1316 = vmul.f32 %v1194, 1.442695
      %v1317 = vmul.f32 %v1196, 1.442695
      %v1318 = vmul.f32 %v1198, 1.442695
      %v1319 = vmul.f32 %v1200, 1.442695
      %v1320 = vmul.f32 %v1202, 1.442695
      %v1321 = vmul.f32 %v1204, 1.442695
      %v1322 = vmul.f32 %v1206, 1.442695
      %v1323 = vmul.f32 %v1208, 1.442695
      %v1324 = vmul.f32 %v1210, 1.442695
      %v1325 = vmul.f32 %v1212, 1.442695
      %v1326 = vmul.f32 %v1214, 1.442695
      %v1327 = vmul.f32 %v1216, 1.442695
      %v1328 = vmul.f32 %v1218, 1.442695
      %v1329 = vmul.f32 %v1220, 1.442695
      %v1330 = vmul.f32 %v1222, 1.442695
      %v1331 = vmul.f32 %v1224, 1.442695
      %v1332 = vmul.f32 %v1226, 1.442695
      %v1333 = vmul.f32 %v1228, 1.442695
      %v1334 = vmul.f32 %v1230, 1.442695
      %v1335 = vmul.f32 %v1232, 1.442695
      %v1336 = vmul.f32 %v1234, 1.442695
      %v1337 = vmul.f32 %v1236, 1.442695
      %v1338 = vmul.f32 %v1238, 1.442695
      %v1339 = vmul.f32 %v1240, 1.442695
      %v1340 = vmul.f32 %v1242, 1.442695
      %v1341 = vmul.f32 %v1244, 1.442695
      %v1342 = vmul.f32 %v1246, 1.442695
      %v1343 = vmul.f32 %v1248, 1.442695
      %v1344 = vmul.f32 %v1250, 1.442695
      %v1345 = vmul.f32 %v1252, 1.442695
      %v1346 = vmul.f32 %v1254, 1.442695
      %v1347 = vmul.f32 %v1256, 1.442695
      %v1348 = vmul.f32 %v1258, 1.442695
      %v1349 = vmul.f32 %v1260, 1.442695
      %v1350 = vmul.f32 %v1262, 1.442695
      %v1351 = vmul.f32 %v1264, 1.442695
      %v1352 = vmul.f32 %v1266, 1.442695
      %v1353 = vmul.f32 %v1268, 1.442695
      %v1354 = vmul.f32 %v1270, 1.442695
      %v1355 = vmul.f32 %v1272, 1.442695
      %v1356 = vmul.f32 %v1274, 1.442695
      %v1357 = vmul.f32 %v1276, 1.442695
      %v1358 = vmul.f32 %v1278, 1.442695
      %v1359 = vmul.f32 %v1280, 1.442695
      %v1360 = vmul.f32 %v1282, 1.442695
      %v1361 = vmul.f32 %v1284, 1.442695
      %v1362 = vmul.f32 %v1286, 1.442695
      %v1363 = vmul.f32 %v1288, 1.442695
      %v1364 = vmul.f32 %v1290, 1.442695
      %v1365 = vmul.f32 %v1292, 1.442695
      %v1366 = vmul.f32 %v1294, 1.442695
      %v1367 = vmul.f32 %v1296, 1.442695
      %v1368 = vmul.f32 %v1298, 1.442695
      %v1369 = vmul.f32 %v1300, 1.442695
      %v1370 = vmul.f32 %v1302, 1.442695
      %v1371 = vmul.f32 %v1304, 1.442695
      %v1372 = vmul.f32 %v1306, 1.442695
      %v1373 = vmul.f32 %v1308, 1.442695
      %v1374 = vmul.f32 %v1310, 1.442695
      %1375 = vst [vmem:[#allocation8] sm:$0xff] %v1311
      %1376 = vst [vmem:[#allocation8 + $0x8] sm:$0xff] %v1312
      %1377 = vst [vmem:[#allocation8 + $0x10] sm:$0xff] %v1313
      %1378 = vst [vmem:[#allocation8 + $0x18] sm:$0xff] %v1314
      %1379 = vst [vmem:[#allocation8 + $0x20] sm:$0xff] %v1315
      %1380 = vst [vmem:[#allocation8 + $0x28] sm:$0xff] %v1316
      %1381 = vst [vmem:[#allocation8 + $0x30] sm:$0xff] %v1317
      %1382 = vst [vmem:[#allocation8 + $0x38] sm:$0xff] %v1318
      %1383 = vst [vmem:[#allocation8 + $0x40] sm:$0xff] %v1319
      %1384 = vst [vmem:[#allocation8 + $0x48] sm:$0xff] %v1320
      %1385 = vst [vmem:[#allocation8 + $0x50] sm:$0xff] %v1321
      %1386 = vst [vmem:[#allocation8 + $0x58] sm:$0xff] %v1322
      %1387 = vst [vmem:[#allocation8 + $0x60] sm:$0xff] %v1323
      %1388 = vst [vmem:[#allocation8 + $0x68] sm:$0xff] %v1324
      %1389 = vst [vmem:[#allocation8 + $0x70] sm:$0xff] %v1325
      %1390 = vst [vmem:[#allocation8 + $0x78] sm:$0xff] %v1326
      %1391 = vst [vmem:[#allocation8 + $0x80] sm:$0xff] %v1327
      %1392 = vst [vmem:[#allocation8 + $0x88] sm:$0xff] %v1328
      %1393 = vst [vmem:[#allocation8 + $0x90] sm:$0xff] %v1329
      %1394 = vst [vmem:[#allocation8 + $0x98] sm:$0xff] %v1330
      %1395 = vst [vmem:[#allocation8 + $0xa0] sm:$0xff] %v1331
      %1396 = vst [vmem:[#allocation8 + $0xa8] sm:$0xff] %v1332
      %1397 = vst [vmem:[#allocation8 + $0xb0] sm:$0xff] %v1333
      %1398 = vst [vmem:[#allocation8 + $0xb8] sm:$0xff] %v1334
      %1399 = vst [vmem:[#allocation8 + $0xc0] sm:$0xff] %v1335
      %1400 = vst [vmem:[#allocation8 + $0xc8] sm:$0xff] %v1336
      %1401 = vst [vmem:[#allocation8 + $0xd0] sm:$0xff] %v1337
      %1402 = vst [vmem:[#allocation8 + $0xd8] sm:$0xff] %v1338
      %1403 = vst [vmem:[#allocation8 + $0xe0] sm:$0xff] %v1339
      %1404 = vst [vmem:[#allocation8 + $0xe8] sm:$0xff] %v1340
      %1405 = vst [vmem:[#allocation8 + $0xf0] sm:$0xff] %v1341
      %1406 = vst [vmem:[#allocation8 + $0xf8] sm:$0xff] %v1342
      %1407 = vst [vmem:[#allocation8 + $0x100] sm:$0xff] %v1343
      %1408 = vst [vmem:[#allocation8 + $0x108] sm:$0xff] %v1344
      %1409 = vst [vmem:[#allocation8 + $0x110] sm:$0xff] %v1345
      %1410 = vst [vmem:[#allocation8 + $0x118] sm:$0xff] %v1346
      %1411 = vst [vmem:[#allocation8 + $0x120] sm:$0xff] %v1347
      %1412 = vst [vmem:[#allocation8 + $0x128] sm:$0xff] %v1348
      %1413 = vst [vmem:[#allocation8 + $0x130] sm:$0xff] %v1349
      %1414 = vst [vmem:[#allocation8 + $0x138] sm:$0xff] %v1350
      %1415 = vst [vmem:[#allocation8 + $0x140] sm:$0xff] %v1351
      %1416 = vst [vmem:[#allocation8 + $0x148] sm:$0xff] %v1352
      %1417 = vst [vmem:[#allocation8 + $0x150] sm:$0xff] %v1353
      %1418 = vst [vmem:[#allocation8 + $0x158] sm:$0xff] %v1354
      %1419 = vst [vmem:[#allocation8 + $0x160] sm:$0xff] %v1355
      %1420 = vst [vmem:[#allocation8 + $0x168] sm:$0xff] %v1356
      %1421 = vst [vmem:[#allocation8 + $0x170] sm:$0xff] %v1357
      %1422 = vst [vmem:[#allocation8 + $0x178] sm:$0xff] %v1358
      %1423 = vst [vmem:[#allocation8 + $0x180] sm:$0xff] %v1359
      %1424 = vst [vmem:[#allocation8 + $0x188] sm:$0xff] %v1360
      %1425 = vst [vmem:[#allocation8 + $0x190] sm:$0xff] %v1361
      %1426 = vst [vmem:[#allocation8 + $0x198] sm:$0xff] %v1362
      %1427 = vst [vmem:[#allocation8 + $0x1a0] sm:$0xff] %v1363
      %1428 = vst [vmem:[#allocation8 + $0x1a8] sm:$0xff] %v1364
      %1429 = vst [vmem:[#allocation8 + $0x1b0] sm:$0xff] %v1365
      %1430 = vst [vmem:[#allocation8 + $0x1b8] sm:$0xff] %v1366
      %1431 = vst [vmem:[#allocation8 + $0x1c0] sm:$0xff] %v1367
      %1432 = vst [vmem:[#allocation8 + $0x1c8] sm:$0xff] %v1368
      %1433 = vst [vmem:[#allocation8 + $0x1d0] sm:$0xff] %v1369
      %1434 = vst [vmem:[#allocation8 + $0x1d8] sm:$0xff] %v1370
      %1435 = vst [vmem:[#allocation8 + $0x1e0] sm:$0xff] %v1371
      %1436 = vst [vmem:[#allocation8 + $0x1e8] sm:$0xff] %v1372
      %1437 = vst [vmem:[#allocation8 + $0x1f0] sm:$0xff] %v1373
      %1438 = vst [vmem:[#allocation8 + $0x1f8] sm:$0xff] %v1374
      %vm1439 = vcmp.gt.f32.partialorder %v991, 0.0
      %vm1440 = vcmp.gt.f32.partialorder %v992, 0.0
      %vm1441 = vcmp.gt.f32.partialorder %v993, 0.0
      %vm1442 = vcmp.gt.f32.partialorder %v994, 0.0
      %vm1443 = vcmp.gt.f32.partialorder %v995, 0.0
      %vm1444 = vcmp.gt.f32.partialorder %v996, 0.0
      %vm1445 = vcmp.gt.f32.partialorder %v997, 0.0
      %vm1446 = vcmp.gt.f32.partialorder %v998, 0.0
      %vm1447 = vcmp.gt.f32.partialorder %v999, 0.0
      %vm1448 = vcmp.gt.f32.partialorder %v1000, 0.0
      %vm1449 = vcmp.gt.f32.partialorder %v1001, 0.0
      %vm1450 = vcmp.gt.f32.partialorder %v1002, 0.0
      %vm1451 = vcmp.gt.f32.partialorder %v1003, 0.0
      %vm1452 = vcmp.gt.f32.partialorder %v1004, 0.0
      %vm1453 = vcmp.gt.f32.partialorder %v1005, 0.0
      %vm1454 = vcmp.gt.f32.partialorder %v1006, 0.0
      %vm1455 = vcmp.gt.f32.partialorder %v1007, 0.0
      %vm1456 = vcmp.gt.f32.partialorder %v1008, 0.0
      %vm1457 = vcmp.gt.f32.partialorder %v1009, 0.0
      %vm1458 = vcmp.gt.f32.partialorder %v1010, 0.0
      %vm1459 = vcmp.gt.f32.partialorder %v1011, 0.0
      %vm1460 = vcmp.gt.f32.partialorder %v1012, 0.0
      %vm1461 = vcmp.gt.f32.partialorder %v1013, 0.0
      %vm1462 = vcmp.gt.f32.partialorder %v1014, 0.0
      %vm1463 = vcmp.gt.f32.partialorder %v1015, 0.0
      %vm1464 = vcmp.gt.f32.partialorder %v1016, 0.0
      %vm1465 = vcmp.gt.f32.partialorder %v1017, 0.0
      %vm1466 = vcmp.gt.f32.partialorder %v1018, 0.0
      %vm1467 = vcmp.gt.f32.partialorder %v1019, 0.0
      %vm1468 = vcmp.gt.f32.partialorder %v1020, 0.0
      %vm1469 = vcmp.gt.f32.partialorder %v1021, 0.0
      %vm1470 = vcmp.gt.f32.partialorder %v1022, 0.0
      %vm1471 = vcmp.gt.f32.partialorder %v1023, 0.0
      %vm1472 = vcmp.gt.f32.partialorder %v1024, 0.0
      %vm1473 = vcmp.gt.f32.partialorder %v1025, 0.0
      %vm1474 = vcmp.gt.f32.partialorder %v1026, 0.0
      %vm1475 = vcmp.gt.f32.partialorder %v1027, 0.0
      %vm1476 = vcmp.gt.f32.partialorder %v1028, 0.0
      %vm1477 = vcmp.gt.f32.partialorder %v1029, 0.0
      %vm1478 = vcmp.gt.f32.partialorder %v1030, 0.0
      %vm1479 = vcmp.gt.f32.partialorder %v1031, 0.0
      %vm1480 = vcmp.gt.f32.partialorder %v1032, 0.0
      %vm1481 = vcmp.gt.f32.partialorder %v1033, 0.0
      %vm1482 = vcmp.gt.f32.partialorder %v1034, 0.0
      %vm1483 = vcmp.gt.f32.partialorder %v1035, 0.0
      %vm1484 = vcmp.gt.f32.partialorder %v1036, 0.0
      %vm1485 = vcmp.gt.f32.partialorder %v1037, 0.0
      %vm1486 = vcmp.gt.f32.partialorder %v1038, 0.0
      %vm1487 = vcmp.gt.f32.partialorder %v1039, 0.0
      %vm1488 = vcmp.gt.f32.partialorder %v1040, 0.0
      %vm1489 = vcmp.gt.f32.partialorder %v1041, 0.0
      %vm1490 = vcmp.gt.f32.partialorder %v1042, 0.0
      %vm1491 = vcmp.gt.f32.partialorder %v1043, 0.0
      %vm1492 = vcmp.gt.f32.partialorder %v1044, 0.0
      %vm1493 = vcmp.gt.f32.partialorder %v1045, 0.0
      %vm1494 = vcmp.gt.f32.partialorder %v1046, 0.0
      %vm1495 = vcmp.gt.f32.partialorder %v1047, 0.0
      %vm1496 = vcmp.gt.f32.partialorder %v1048, 0.0
      %vm1497 = vcmp.gt.f32.partialorder %v1049, 0.0
      %vm1498 = vcmp.gt.f32.partialorder %v1050, 0.0
      %vm1499 = vcmp.gt.f32.partialorder %v1051, 0.0
      %vm1500 = vcmp.gt.f32.partialorder %v1052, 0.0
      %vm1501 = vcmp.gt.f32.partialorder %v1053, 0.0
      %vm1502 = vcmp.gt.f32.partialorder %v1054, 0.0
      %vm1503 = vcmp.lt.f32.partialorder %v991, 0.0
      %vm1504 = vcmp.lt.f32.partialorder %v992, 0.0
      %vm1505 = vcmp.lt.f32.partialorder %v993, 0.0
      %vm1506 = vcmp.lt.f32.partialorder %v994, 0.0
      %vm1507 = vcmp.lt.f32.partialorder %v995, 0.0
      %vm1508 = vcmp.lt.f32.partialorder %v996, 0.0
      %vm1509 = vcmp.lt.f32.partialorder %v997, 0.0
      %vm1510 = vcmp.lt.f32.partialorder %v998, 0.0
      %vm1511 = vcmp.lt.f32.partialorder %v999, 0.0
      %vm1512 = vcmp.lt.f32.partialorder %v1000, 0.0
      %vm1513 = vcmp.lt.f32.partialorder %v1001, 0.0
      %vm1514 = vcmp.lt.f32.partialorder %v1002, 0.0
      %vm1515 = vcmp.lt.f32.partialorder %v1003, 0.0
      %vm1516 = vcmp.lt.f32.partialorder %v1004, 0.0
      %vm1517 = vcmp.lt.f32.partialorder %v1005, 0.0
      %vm1518 = vcmp.lt.f32.partialorder %v1006, 0.0
      %vm1519 = vcmp.lt.f32.partialorder %v1007, 0.0
      %vm1520 = vcmp.lt.f32.partialorder %v1008, 0.0
      %vm1521 = vcmp.lt.f32.partialorder %v1009, 0.0
      %vm1522 = vcmp.lt.f32.partialorder %v1010, 0.0
      %vm1523 = vcmp.lt.f32.partialorder %v1011, 0.0
      %vm1524 = vcmp.lt.f32.partialorder %v1012, 0.0
      %vm1525 = vcmp.lt.f32.partialorder %v1013, 0.0
      %vm1526 = vcmp.lt.f32.partialorder %v1014, 0.0
      %vm1527 = vcmp.lt.f32.partialorder %v1015, 0.0
      %vm1528 = vcmp.lt.f32.partialorder %v1016, 0.0
      %vm1529 = vcmp.lt.f32.partialorder %v1017, 0.0
      %vm1530 = vcmp.lt.f32.partialorder %v1018, 0.0
      %vm1531 = vcmp.lt.f32.partialorder %v1019, 0.0
      %vm1532 = vcmp.lt.f32.partialorder %v1020, 0.0
      %vm1533 = vcmp.lt.f32.partialorder %v1021, 0.0
      %vm1534 = vcmp.lt.f32.partialorder %v1022, 0.0
      %vm1535 = vcmp.lt.f32.partialorder %v1023, 0.0
      %vm1536 = vcmp.lt.f32.partialorder %v1024, 0.0
      %vm1537 = vcmp.lt.f32.partialorder %v1025, 0.0
      %vm1538 = vcmp.lt.f32.partialorder %v1026, 0.0
      %vm1539 = vcmp.lt.f32.partialorder %v1027, 0.0
      %vm1540 = vcmp.lt.f32.partialorder %v1028, 0.0
      %vm1541 = vcmp.lt.f32.partialorder %v1029, 0.0
      %vm1542 = vcmp.lt.f32.partialorder %v1030, 0.0
      %vm1543 = vcmp.lt.f32.partialorder %v1031, 0.0
      %vm1544 = vcmp.lt.f32.partialorder %v1032, 0.0
      %vm1545 = vcmp.lt.f32.partialorder %v1033, 0.0
      %vm1546 = vcmp.lt.f32.partialorder %v1034, 0.0
      %vm1547 = vcmp.lt.f32.partialorder %v1035, 0.0
      %vm1548 = vcmp.lt.f32.partialorder %v1036, 0.0
      %vm1549 = vcmp.lt.f32.partialorder %v1037, 0.0
      %vm1550 = vcmp.lt.f32.partialorder %v1038, 0.0
      %vm1551 = vcmp.lt.f32.partialorder %v1039, 0.0
      %vm1552 = vcmp.lt.f32.partialorder %v1040, 0.0
      %vm1553 = vcmp.lt.f32.partialorder %v1041, 0.0
      %vm1554 = vcmp.lt.f32.partialorder %v1042, 0.0
      %vm1555 = vcmp.lt.f32.partialorder %v1043, 0.0
      %vm1556 = vcmp.lt.f32.partialorder %v1044, 0.0
      %vm1557 = vcmp.lt.f32.partialorder %v1045, 0.0
      %vm1558 = vcmp.lt.f32.partialorder %v1046, 0.0
      %vm1559 = vcmp.lt.f32.partialorder %v1047, 0.0
      %vm1560 = vcmp.lt.f32.partialorder %v1048, 0.0
      %vm1561 = vcmp.lt.f32.partialorder %v1049, 0.0
      %vm1562 = vcmp.lt.f32.partialorder %v1050, 0.0
      %vm1563 = vcmp.lt.f32.partialorder %v1051, 0.0
      %vm1564 = vcmp.lt.f32.partialorder %v1052, 0.0
      %vm1565 = vcmp.lt.f32.partialorder %v1053, 0.0
      %vm1566 = vcmp.lt.f32.partialorder %v1054, 0.0
      %v1567 = vsel %vm1503, -1.0, 0.0
      %v1568 = vsel %vm1504, -1.0, 0.0
      %v1569 = vsel %vm1505, -1.0, 0.0
      %v1570 = vsel %vm1506, -1.0, 0.0
      %v1571 = vsel %vm1507, -1.0, 0.0
      %v1572 = vsel %vm1508, -1.0, 0.0
      %v1573 = vsel %vm1509, -1.0, 0.0
      %v1574 = vsel %vm1510, -1.0, 0.0
      %v1575 = vsel %vm1511, -1.0, 0.0
      %v1576 = vsel %vm1512, -1.0, 0.0
      %v1577 = vsel %vm1513, -1.0, 0.0
      %v1578 = vsel %vm1514, -1.0, 0.0
      %v1579 = vsel %vm1515, -1.0, 0.0
      %v1580 = vsel %vm1516, -1.0, 0.0
      %v1581 = vsel %vm1517, -1.0, 0.0
      %v1582 = vsel %vm1518, -1.0, 0.0
      %v1583 = vsel %vm1519, -1.0, 0.0
      %v1584 = vsel %vm1520, -1.0, 0.0
      %v1585 = vsel %vm1521, -1.0, 0.0
      %v1586 = vsel %vm1522, -1.0, 0.0
      %v1587 = vsel %vm1523, -1.0, 0.0
      %v1588 = vsel %vm1524, -1.0, 0.0
      %v1589 = vsel %vm1525, -1.0, 0.0
      %v1590 = vsel %vm1526, -1.0, 0.0
      %v1591 = vsel %vm1527, -1.0, 0.0
      %v1592 = vsel %vm1528, -1.0, 0.0
      %v1593 = vsel %vm1529, -1.0, 0.0
      %v1594 = vsel %vm1530, -1.0, 0.0
      %v1595 = vsel %vm1531, -1.0, 0.0
      %v1596 = vsel %vm1532, -1.0, 0.0
      %v1597 = vsel %vm1533, -1.0, 0.0
      %v1598 = vsel %vm1534, -1.0, 0.0
      %v1599 = vsel %vm1535, -1.0, 0.0
      %v1600 = vsel %vm1536, -1.0, 0.0
      %v1601 = vsel %vm1537, -1.0, 0.0
      %v1602 = vsel %vm1538, -1.0, 0.0
      %v1603 = vsel %vm1539, -1.0, 0.0
      %v1604 = vsel %vm1540, -1.0, 0.0
      %v1605 = vsel %vm1541, -1.0, 0.0
      %v1606 = vsel %vm1542, -1.0, 0.0
      %v1607 = vsel %vm1543, -1.0, 0.0
      %v1608 = vsel %vm1544, -1.0, 0.0
      %v1609 = vsel %vm1545, -1.0, 0.0
      %v1610 = vsel %vm1546, -1.0, 0.0
      %v1611 = vsel %vm1547, -1.0, 0.0
      %v1612 = vsel %vm1548, -1.0, 0.0
      %v1613 = vsel %vm1549, -1.0, 0.0
      %v1614 = vsel %vm1550, -1.0, 0.0
      %v1615 = vsel %vm1551, -1.0, 0.0
      %v1616 = vsel %vm1552, -1.0, 0.0
      %v1617 = vsel %vm1553, -1.0, 0.0
      %v1618 = vsel %vm1554, -1.0, 0.0
      %v1619 = vsel %vm1555, -1.0, 0.0
      %v1620 = vsel %vm1556, -1.0, 0.0
      %v1621 = vsel %vm1557, -1.0, 0.0
      %v1622 = vsel %vm1558, -1.0, 0.0
      %v1623 = vsel %vm1559, -1.0, 0.0
      %v1624 = vsel %vm1560, -1.0, 0.0
      %v1625 = vsel %vm1561, -1.0, 0.0
      %v1626 = vsel %vm1562, -1.0, 0.0
      %v1627 = vsel %vm1563, -1.0, 0.0
      %v1628 = vsel %vm1564, -1.0, 0.0
      %v1629 = vsel %vm1565, -1.0, 0.0
      %v1630 = vsel %vm1566, -1.0, 0.0
      %v1631 = vsel %vm1439, 1.0, %v1567
      %v1632 = vsel %vm1440, 1.0, %v1568
      %v1633 = vsel %vm1441, 1.0, %v1569
      %v1634 = vsel %vm1442, 1.0, %v1570
      %v1635 = vsel %vm1443, 1.0, %v1571
      %v1636 = vsel %vm1444, 1.0, %v1572
      %v1637 = vsel %vm1445, 1.0, %v1573
      %v1638 = vsel %vm1446, 1.0, %v1574
      %v1639 = vsel %vm1447, 1.0, %v1575
      %v1640 = vsel %vm1448, 1.0, %v1576
      %v1641 = vsel %vm1449, 1.0, %v1577
      %v1642 = vsel %vm1450, 1.0, %v1578
      %v1643 = vsel %vm1451, 1.0, %v1579
      %v1644 = vsel %vm1452, 1.0, %v1580
      %v1645 = vsel %vm1453, 1.0, %v1581
      %v1646 = vsel %vm1454, 1.0, %v1582
      %v1647 = vsel %vm1455, 1.0, %v1583
      %v1648 = vsel %vm1456, 1.0, %v1584
      %v1649 = vsel %vm1457, 1.0, %v1585
      %v1650 = vsel %vm1458, 1.0, %v1586
      %v1651 = vsel %vm1459, 1.0, %v1587
      %v1652 = vsel %vm1460, 1.0, %v1588
      %v1653 = vsel %vm1461, 1.0, %v1589
      %v1654 = vsel %vm1462, 1.0, %v1590
      %v1655 = vsel %vm1463, 1.0, %v1591
      %v1656 = vsel %vm1464, 1.0, %v1592
      %v1657 = vsel %vm1465, 1.0, %v1593
      %v1658 = vsel %vm1466, 1.0, %v1594
      %v1659 = vsel %vm1467, 1.0, %v1595
      %v1660 = vsel %vm1468, 1.0, %v1596
      %v1661 = vsel %vm1469, 1.0, %v1597
      %v1662 = vsel %vm1470, 1.0, %v1598
      %v1663 = vsel %vm1471, 1.0, %v1599
      %v1664 = vsel %vm1472, 1.0, %v1600
      %v1665 = vsel %vm1473, 1.0, %v1601
      %v1666 = vsel %vm1474, 1.0, %v1602
      %v1667 = vsel %vm1475, 1.0, %v1603
      %v1668 = vsel %vm1476, 1.0, %v1604
      %v1669 = vsel %vm1477, 1.0, %v1605
      %v1670 = vsel %vm1478, 1.0, %v1606
      %v1671 = vsel %vm1479, 1.0, %v1607
      %v1672 = vsel %vm1480, 1.0, %v1608
      %v1673 = vsel %vm1481, 1.0, %v1609
      %v1674 = vsel %vm1482, 1.0, %v1610
      %v1675 = vsel %vm1483, 1.0, %v1611
      %v1676 = vsel %vm1484, 1.0, %v1612
      %v1677 = vsel %vm1485, 1.0, %v1613
      %v1678 = vsel %vm1486, 1.0, %v1614
      %v1679 = vsel %vm1487, 1.0, %v1615
      %v1680 = vsel %vm1488, 1.0, %v1616
      %v1681 = vsel %vm1489, 1.0, %v1617
      %v1682 = vsel %vm1490, 1.0, %v1618
      %v1683 = vsel %vm1491, 1.0, %v1619
      %v1684 = vsel %vm1492, 1.0, %v1620
      %v1685 = vsel %vm1493, 1.0, %v1621
      %v1686 = vsel %vm1494, 1.0, %v1622
      %v1687 = vsel %vm1495, 1.0, %v1623
      %v1688 = vsel %vm1496, 1.0, %v1624
      %v1689 = vsel %vm1497, 1.0, %v1625
      %v1690 = vsel %vm1498, 1.0, %v1626
      %v1691 = vsel %vm1499, 1.0, %v1627
      %v1692 = vsel %vm1500, 1.0, %v1628
      %v1693 = vsel %vm1501, 1.0, %v1629
      %v1694 = vsel %vm1502, 1.0, %v1630
      %v1695 = vtrunc.f32 %v1631
      %v1696 = vtrunc.f32 %v1632
      %v1697 = vtrunc.f32 %v1633
      %v1698 = vtrunc.f32 %v1634
      %v1699 = vtrunc.f32 %v1635
      %v1700 = vtrunc.f32 %v1636
      %v1701 = vtrunc.f32 %v1637
      %v1702 = vtrunc.f32 %v1638
      %v1703 = vtrunc.f32 %v1639
      %v1704 = vtrunc.f32 %v1640
      %v1705 = vtrunc.f32 %v1641
      %v1706 = vtrunc.f32 %v1642
      %v1707 = vtrunc.f32 %v1643
      %v1708 = vtrunc.f32 %v1644
      %v1709 = vtrunc.f32 %v1645
      %v1710 = vtrunc.f32 %v1646
      %v1711 = vtrunc.f32 %v1647
      %v1712 = vtrunc.f32 %v1648
      %v1713 = vtrunc.f32 %v1649
      %v1714 = vtrunc.f32 %v1650
      %v1715 = vtrunc.f32 %v1651
      %v1716 = vtrunc.f32 %v1652
      %v1717 = vtrunc.f32 %v1653
      %v1718 = vtrunc.f32 %v1654
      %v1719 = vtrunc.f32 %v1655
      %v1720 = vtrunc.f32 %v1656
      %v1721 = vtrunc.f32 %v1657
      %v1722 = vtrunc.f32 %v1658
      %v1723 = vtrunc.f32 %v1659
      %v1724 = vtrunc.f32 %v1660
      %v1725 = vtrunc.f32 %v1661
      %v1726 = vtrunc.f32 %v1662
      %v1727 = vtrunc.f32 %v1663
      %v1728 = vtrunc.f32 %v1664
      %v1729 = vtrunc.f32 %v1665
      %v1730 = vtrunc.f32 %v1666
      %v1731 = vtrunc.f32 %v1667
      %v1732 = vtrunc.f32 %v1668
      %v1733 = vtrunc.f32 %v1669
      %v1734 = vtrunc.f32 %v1670
      %v1735 = vtrunc.f32 %v1671
      %v1736 = vtrunc.f32 %v1672
      %v1737 = vtrunc.f32 %v1673
      %v1738 = vtrunc.f32 %v1674
      %v1739 = vtrunc.f32 %v1675
      %v1740 = vtrunc.f32 %v1676
      %v1741 = vtrunc.f32 %v1677
      %v1742 = vtrunc.f32 %v1678
      %v1743 = vtrunc.f32 %v1679
      %v1744 = vtrunc.f32 %v1680
      %v1745 = vtrunc.f32 %v1681
      %v1746 = vtrunc.f32 %v1682
      %v1747 = vtrunc.f32 %v1683
      %v1748 = vtrunc.f32 %v1684
      %v1749 = vtrunc.f32 %v1685
      %v1750 = vtrunc.f32 %v1686
      %v1751 = vtrunc.f32 %v1687
      %v1752 = vtrunc.f32 %v1688
      %v1753 = vtrunc.f32 %v1689
      %v1754 = vtrunc.f32 %v1690
      %v1755 = vtrunc.f32 %v1691
      %v1756 = vtrunc.f32 %v1692
      %v1757 = vtrunc.f32 %v1693
      %v1758 = vtrunc.f32 %v1694
      %v1759 = vpack.c.f32.eXmY %v1695, %v1696, 312
      %v1763 = vpack.c.f32.eXmY %v1697, %v1698, 312
      %v1767 = vpack.c.b8 %v1763, %v1759
      %v1769 = vpack.c.f32.eXmY %v1699, %v1700, 312
      %v1773 = vpack.c.f32.eXmY %v1701, %v1702, 312
      %v1777 = vpack.c.b8 %v1773, %v1769
      %v1779 = vpack.c.f32.eXmY %v1703, %v1704, 312
      %v1783 = vpack.c.f32.eXmY %v1705, %v1706, 312
      %v1787 = vpack.c.b8 %v1783, %v1779
      %v1789 = vpack.c.f32.eXmY %v1707, %v1708, 312
      %v1793 = vpack.c.f32.eXmY %v1709, %v1710, 312
      %v1797 = vpack.c.b8 %v1793, %v1789
      %v1799 = vpack.c.f32.eXmY %v1711, %v1712, 312
      %v1803 = vpack.c.f32.eXmY %v1713, %v1714, 312
      %v1807 = vpack.c.b8 %v1803, %v1799
      %v1809 = vpack.c.f32.eXmY %v1715, %v1716, 312
      %v1813 = vpack.c.f32.eXmY %v1717, %v1718, 312
      %v1817 = vpack.c.b8 %v1813, %v1809
      %v1819 = vpack.c.f32.eXmY %v1719, %v1720, 312
      %v1823 = vpack.c.f32.eXmY %v1721, %v1722, 312
      %v1827 = vpack.c.b8 %v1823, %v1819
      %v1829 = vpack.c.f32.eXmY %v1723, %v1724, 312
      %v1833 = vpack.c.f32.eXmY %v1725, %v1726, 312
      %v1837 = vpack.c.b8 %v1833, %v1829
      %v1839 = vpack.c.f32.eXmY %v1727, %v1728, 312
      %v1843 = vpack.c.f32.eXmY %v1729, %v1730, 312
      %v1847 = vpack.c.b8 %v1843, %v1839
      %v1849 = vpack.c.f32.eXmY %v1731, %v1732, 312
      %v1853 = vpack.c.f32.eXmY %v1733, %v1734, 312
      %v1857 = vpack.c.b8 %v1853, %v1849
      %v1859 = vpack.c.f32.eXmY %v1735, %v1736, 312
      %v1863 = vpack.c.f32.eXmY %v1737, %v1738, 312
      %v1867 = vpack.c.b8 %v1863, %v1859
      %v1869 = vpack.c.f32.eXmY %v1739, %v1740, 312
      %v1873 = vpack.c.f32.eXmY %v1741, %v1742, 312
      %v1877 = vpack.c.b8 %v1873, %v1869
      %v1879 = vpack.c.f32.eXmY %v1743, %v1744, 312
      %v1883 = vpack.c.f32.eXmY %v1745, %v1746, 312
      %v1887 = vpack.c.b8 %v1883, %v1879
      %v1889 = vpack.c.f32.eXmY %v1747, %v1748, 312
      %v1893 = vpack.c.f32.eXmY %v1749, %v1750, 312
      %v1897 = vpack.c.b8 %v1893, %v1889
      %v1899 = vpack.c.f32.eXmY %v1751, %v1752, 312
      %v1903 = vpack.c.f32.eXmY %v1753, %v1754, 312
      %v1907 = vpack.c.b8 %v1903, %v1899
      %v1909 = vpack.c.f32.eXmY %v1755, %v1756, 312
      %v1913 = vpack.c.f32.eXmY %v1757, %v1758, 312
      %v1917 = vpack.c.b8 %v1913, %v1909
      %1919 = vst [vmem:[#allocation10] sm:$0xff] %v1767
      %1920 = vst [vmem:[#allocation10 + $0x8] sm:$0xff] %v1777
      %1921 = vst [vmem:[#allocation10 + $0x10] sm:$0xff] %v1787
      %1922 = vst [vmem:[#allocation10 + $0x18] sm:$0xff] %v1797
      %1923 = vst [vmem:[#allocation10 + $0x20] sm:$0xff] %v1807
      %1924 = vst [vmem:[#allocation10 + $0x28] sm:$0xff] %v1817
      %1925 = vst [vmem:[#allocation10 + $0x30] sm:$0xff] %v1827
      %1926 = vst [vmem:[#allocation10 + $0x38] sm:$0xff] %v1837
      %1927 = vst [vmem:[#allocation10 + $0x40] sm:$0xff] %v1847
      %1928 = vst [vmem:[#allocation10 + $0x48] sm:$0xff] %v1857
      %1929 = vst [vmem:[#allocation10 + $0x50] sm:$0xff] %v1867
      %1930 = vst [vmem:[#allocation10 + $0x58] sm:$0xff] %v1877
      %1931 = vst [vmem:[#allocation10 + $0x60] sm:$0xff] %v1887
      %1932 = vst [vmem:[#allocation10 + $0x68] sm:$0xff] %v1897
      %1933 = vst [vmem:[#allocation10 + $0x70] sm:$0xff] %v1907
      %1934 = vst [vmem:[#allocation10 + $0x78] sm:$0xff] %v1917
    $region29: #{tpu_custom_call.1} parent=1 // pred_fallthru
      _
    // Predicated region
    $region30: #{tpu_custom_call.1} parent=1 // pred_check
      _
    $region31: #{tpu_custom_call.1} parent=1 // pred_check_branch
      %1936 = sbr.rel (0) target = $region33
    $region32: #{tpu_custom_call.1} parent=1 // pred_region
      %s1938 = ssub.s32 8192, 8192
      %1939 = vsyncadd [#allocation4], %s1938
      %s1940 = sshll.u32 [#allocation7], 4
      %s1941 = int_to_ptr.vmem [resolvable:$true] %s1940
      %1946 = dma.vmem_to_hbm [thread:$0]  %s1941, 8192, %s3, [#allocation4], 128, 128, 8
    $region33: #{tpu_custom_call.1} parent=1 // pred_fallthru
      _
    // Predicated region
    $region34: #{tpu_custom_call.1} parent=1 // pred_check
      _
    $region35: #{tpu_custom_call.1} parent=1 // pred_check_branch
      %1948 = sbr.rel (0) target = $region37
    $region36: #{tpu_custom_call.1} parent=1 // pred_region
      %s1950 = ssub.s32 8192, 8192
      %1951 = vsyncadd [#allocation9], %s1950
      %s1952 = sshll.u32 [#allocation8], 4
      %s1953 = int_to_ptr.vmem [resolvable:$true] %s1952
      %1958 = dma.vmem_to_hbm [thread:$0]  %s1953, 8192, %s4, [#allocation9], 128, 128, 8
    $region37: #{tpu_custom_call.1} parent=1 // pred_fallthru
      _
    // Predicated region
    $region38: #{tpu_custom_call.1} parent=1 // pred_check
      _
    $region39: #{tpu_custom_call.1} parent=1 // pred_check_branch
      %1960 = sbr.rel (0) target = $region41
    $region40: #{tpu_custom_call.1} parent=1 // pred_region
      %s1962 = ssub.s32 2048, 2048
      %1963 = vsyncadd [#allocation9], %s1962
      %s1964 = sshll.u32 [#allocation10], 4
      %s1965 = int_to_ptr.vmem [resolvable:$true] %s1964
      %1970 = dma.vmem_to_hbm [thread:$0]  %s1965, 2048, %s5, [#allocation9], 128, 128, 8
    $region41: #{tpu_custom_call.1} parent=1 // pred_fallthru
      _
    // Predicated region
    $region42: #{tpu_custom_call.1} parent=1 // pred_check
      _
    $region43: #{tpu_custom_call.1} parent=1 // pred_check_branch
      %1972 = sbr.rel (0) target = $region45
    $region44: #{tpu_custom_call.1} parent=1 // pred_region
      %1973 = dma.done [#allocation4], 8192
    $region45: #{tpu_custom_call.1} parent=1 // pred_fallthru
      _
    // Predicated region
    $region46: #{tpu_custom_call.1} parent=1 // pred_check
      _
    $region47: #{tpu_custom_call.1} parent=1 // pred_check_branch
      %1975 = sbr.rel (0) target = $region49
    $region48: #{tpu_custom_call.1} parent=1 // pred_region
      %1976 = dma.done [#allocation9], 8192
    $region49: #{tpu_custom_call.1} parent=1 // pred_fallthru
      _
    // Predicated region
    $region50: #{tpu_custom_call.1} parent=1 // pred_check
      _
    $region51: #{tpu_custom_call.1} parent=1 // pred_check_branch
      %1978 = sbr.rel (0) target = $region53
    $region52: #{tpu_custom_call.1} parent=1 // pred_region
      %1979 = dma.done [#allocation9], 2048
    $region53: #{tpu_custom_call.1} parent=1 // pred_fallthru
      _
    %1980 = vsyncpa [#allocation3], 1
    %1981 = vsyncpa [#allocation6], 1
    %1982 = vsyncpa [#allocation4], 1
    %1983 = vsyncpa [#allocation9], 1

</llo_original>
